<compile_context>
chip_gen: v7x
topology: tpu7x:2x2x1
jax: 0.10.0
libtpu: 0.0.40
codegen_flags: <defaults>
</compile_context>

<pallas_src>
import functools

import numpy as np
import jax
import jax.numpy as jnp
from jax.experimental import pallas as pl
from jax.experimental.pallas import tpu as pltpu

conv_outDim = 64
init_channels = 4
kernel_size = 3
STRIDE = 2
IMG_HW = 32          # spatial size implied by nn.Linear(32, 64): 32->15->7->3->1
LANES = 128
ROW_PAD = 8          # extra zero rows per chunk: OOB guard for batched ki=2 loads
MAX_CHUNK = 64       # images per grid step (~4 MiB VMEM at 64: fine on v5e/v6e/v7x)

# spatial sizes after each valid stride-2 3x3 conv
_H = [IMG_HW]
for _ in range(4):
    _H.append((_H[-1] - kernel_size) // STRIDE + 1)
H0, H1, H2, H3, H4 = _H          # 32, 15, 7, 3, 1
assert H4 == 1

# per-image row pitch of each VMEM-resident activation; halves every layer
# (even pitches are what makes the cross-image batched strided load legal).
P0, P1, P2, P3, P4 = 32, 16, 8, 4, 2
assert P1 >= H1 and P2 >= H2 and P3 >= H3 and P4 >= H4


def _round_up(v, m):
    return (v + m - 1) // m * m


# ----------------------------------------------------------------------------
# Fused kernel: conv1..conv4 (+ReLU) and the final Linear, all in VMEM.
# Activation layout: value[n, h, w, c] lives at scratch row n*P + h, lane w*C + c.
# ----------------------------------------------------------------------------
def _fused_encoder_kernel(x_ref, m1_ref, b1_ref, m2_ref, b2_ref, m3_ref, b3_ref,
                          m4_ref, b4_ref, wfc_ref, bfc_ref,
                          o_ref, a1_ref, a2_ref, a3_ref, a4_ref, *, chunk):
    # Zero the scratch pad rows so the (never-used-downstream) garbage rows stay
    # finite and deterministic.  Tiny stores, once per grid step.
    zpad = jnp.zeros((ROW_PAD, LANES), jnp.float32)
    a1_ref[pl.ds(chunk * P1, ROW_PAD), :] = zpad
    a2_ref[pl.ds(chunk * P2, ROW_PAD), :] = zpad
    a3_ref[pl.ds(chunk * P3, ROW_PAD), :] = zpad

    def conv_layer(in_ref, m_ref, b_ref, out_ref, m_rows):
        # Implicit GEMM: one strided sublane load + one MXU dot per kernel row ki.
        # M spans every image in the chunk.  Each image contributes one garbage
        # row at the tail of its output pitch; those rows are computed but never
        # read when producing valid outputs downstream.
        acc = None
        for ki in range(kernel_size):
            rows = in_ref[pl.ds(ki, m_rows, stride=STRIDE), :].astype(jnp.bfloat16)
            part = jnp.dot(rows, m_ref[ki], preferred_element_type=jnp.float32)
            acc = part if acc is None else acc + part
        # bias + ReLU epilogue stays f32 (v5e has no bf16 VPU path)
        out_ref[pl.ds(0, m_rows), :] = jnp.maximum(acc + b_ref[...], 0.0)

    conv_layer(x_ref, m1_ref, b1_ref, a1_ref, chunk * P1)    # conv1 + ReLU
    conv_layer(a1_ref, m2_ref, b2_ref, a2_ref, chunk * P2)   # conv2 + ReLU
    conv_layer(a2_ref, m3_ref, b3_ref, a3_ref, chunk * P3)   # conv3 + ReLU
    conv_layer(a3_ref, m4_ref, b4_ref, a4_ref, chunk * P4)   # conv4 + ReLU

    # Gather the single valid feature row per image (stride-P4 sublane load) and
    # run the Linear as one (chunk,128)@(128,128) dot; lane-dense full-block
    # store (output lanes 64:128 are structurally zero, sliced off in the wrapper).
    feat = a4_ref[pl.ds(0, chunk, stride=P4), :].astype(jnp.bfloat16)
    o_ref[...] = (jnp.dot(feat, wfc_ref[...], preferred_element_type=jnp.float32)
                  + bfc_ref[...])


def _const_spec(shape):
    zeros = (0,) * len(shape)
    return pl.BlockSpec(shape, lambda b: zeros)   # constant block -> DMA'd once


def _build_fused_call(n_chunks, chunk, lane0):
    kernel = functools.partial(_fused_encoder_kernel, chunk=chunk)
    x_rows = chunk * P0 + ROW_PAD
    in_specs = [
        pl.BlockSpec((x_rows, lane0), lambda b: (b, 0)),                     # input
        _const_spec((kernel_size, lane0, LANES)), _const_spec((1, LANES)),   # conv1
        _const_spec((kernel_size, LANES, LANES)), _const_spec((1, LANES)),   # conv2
        _const_spec((kernel_size, LANES, LANES)), _const_spec((1, LANES)),   # conv3
        _const_spec((kernel_size, LANES, LANES)), _const_spec((1, LANES)),   # conv4
        _const_spec((LANES, LANES)), _const_spec((1, LANES)),                # fc
    ]
    return pl.pallas_call(
        kernel,
        out_shape=jax.ShapeDtypeStruct((n_chunks * chunk, LANES), jnp.float32),
        grid_spec=pltpu.PrefetchScalarGridSpec(
            num_scalar_prefetch=0,
            grid=(n_chunks,),
            in_specs=in_specs,
            out_specs=pl.BlockSpec((chunk, LANES), lambda b: (b, 0)),
            scratch_shapes=[
                pltpu.VMEM((chunk * P1 + ROW_PAD, LANES), jnp.float32),  # conv1 act
                pltpu.VMEM((chunk * P2 + ROW_PAD, LANES), jnp.float32),  # conv2 act
                pltpu.VMEM((chunk * P3 + ROW_PAD, LANES), jnp.float32),  # conv3 act
                pltpu.VMEM((chunk * P4, LANES), jnp.float32),            # conv4 act
            ]),
        compiler_params=pltpu.CompilerParams(
            dimension_semantics=("parallel",)),   # batch chunks -> v7x 2nd TC
    )


# ----------------------------------------------------------------------------
# Parameter init (PyTorch layouts) and one-time offline repack to kernel layout
# ----------------------------------------------------------------------------
def init_params(key, image_channels):
    chans = [image_channels, init_channels, init_channels * 2,
             init_channels * 4, init_channels * 8]
    params = {}
    for layer in range(4):
        key, k_w, k_b = jax.random.split(key, 3)
        cin, cout = chans[layer], chans[layer + 1]
        bound = float(1.0 / np.sqrt(cin * kernel_size * kernel_size))
        params[f"conv{layer + 1}_w"] = jax.random.uniform(
            k_w, (cout, cin, kernel_size, kernel_size), jnp.float32, -bound, bound)
        params[f"conv{layer + 1}_b"] = jax.random.uniform(
            k_b, (cout,), jnp.float32, -bound, bound)
    key, k_w, k_b = jax.random.split(key, 3)
    bound = float(1.0 / np.sqrt(32.0))
    params["fc_w"] = jax.random.uniform(k_w, (conv_outDim, 32), jnp.float32, -bound, bound)
    params["fc_b"] = jax.random.uniform(k_b, (conv_outDim,), jnp.float32, -bound, bound)
    return params


def pack_params(params, image_channels):
    """Offline layout plumbing: conv weights -> per-ki dense row-GEMM matrices
    (bf16), biases tiled across (w, c) lanes (f32), fc weight pre-transposed and
    zero-padded to a 128x128 bf16 tile, fc bias lane-padded to 128 (f32)."""
    widths = [H0, H1, H2, H3]
    outw = [H1, H2, H3, H4]
    chans = [image_channels, init_channels, init_channels * 2,
             init_channels * 4, init_channels * 8]
    lane0 = _round_up(widths[0] * chans[0], LANES)
    packed = {}
    for layer in range(4):
        cin, cout = chans[layer], chans[layer + 1]
        w = np.asarray(params[f"conv{layer + 1}_w"], np.float32)   # (cout, cin, 3, 3)
        b = np.asarray(params[f"conv{layer + 1}_b"], np.float32)
        w_in, w_out = widths[layer], outw[layer]
        in_lanes = lane0 if layer == 0 else LANES
        assert w_in * cin <= in_lanes and w_out * cout <= LANES
        m = np.zeros((kernel_size, in_lanes, LANES), np.float32)
        for ki in range(kernel_size):
            for kj in range(kernel_size):
                blk = w[:, :, ki, kj].T                            # (cin, cout)
                for ow in range(w_out):
                    wi = STRIDE * ow + kj
                    m[ki, wi * cin:(wi + 1) * cin, ow * cout:(ow + 1) * cout] = blk
        bias = np.zeros((1, LANES), np.float32)
        bias[0, :w_out * cout] = np.tile(b, w_out)
        packed[f"m{layer + 1}"] = jnp.asarray(m, jnp.bfloat16)     # bf16 weight DMA
        packed[f"b{layer + 1}"] = jnp.asarray(bias)                # f32 epilogue bias
    wfc = np.zeros((LANES, LANES), np.float32)
    wfc[:32, :conv_outDim] = np.asarray(params["fc_w"], np.float32).T
    bfc = np.zeros((1, LANES), np.float32)
    bfc[0, :conv_outDim] = np.asarray(params["fc_b"], np.float32)
    packed["wfc"] = jnp.asarray(wfc, jnp.bfloat16)
    packed["bfc"] = jnp.asarray(bfc)
    return packed


# ----------------------------------------------------------------------------
# Forward pass (matches ConvEncoder.forward; accepts NCHW like PyTorch)
# ----------------------------------------------------------------------------
def conv_encoder_forward(packed, x_nchw):
    n, c, h, w = x_nchw.shape
    assert (h, w) == (IMG_HW, IMG_HW), "ConvEncoder requires 32x32 input"
    lane0 = packed["m1"].shape[1]

    chunk = n if n <= MAX_CHUNK else MAX_CHUNK
    n_chunks = -(-n // chunk)
    n_pad = n_chunks * chunk
    x = x_nchw.astype(jnp.float32)
    if n_pad != n:
        x = jnp.pad(x, ((0, n_pad - n), (0, 0), (0, 0), (0, 0)))

    # NCHW -> NHWC -> (N*H, W*C) rows (one image row per sublane row), lane pad.
    x2d = jnp.transpose(x, (0, 2, 3, 1)).reshape(n_pad * H0, w * c)
    if w * c < lane0:
        x2d = jnp.pad(x2d, ((0, 0), (0, lane0 - w * c)))
    # per-chunk +ROW_PAD zero rows: OOB guard for the batched ki=2 strided loads
    x3 = x2d.reshape(n_chunks, chunk * H0, lane0)
    x3 = jnp.pad(x3, ((0, 0), (0, ROW_PAD), (0, 0)))
    x_packed = x3.reshape(n_chunks * (chunk * H0 + ROW_PAD), lane0)

    call = _build_fused_call(n_chunks, chunk, lane0)
    out = call(x_packed,
               packed["m1"], packed["b1"], packed["m2"], packed["b2"],
               packed["m3"], packed["b3"], packed["m4"], packed["b4"],
               packed["wfc"], packed["bfc"])
    return out[:n, :conv_outDim]


# ----------------------------------------------------------------------------
# Pure-JAX reference (f32, for correctness check)
# ----------------------------------------------------------------------------
def _reference_forward(params, x_nchw):
    x = x_nchw.astype(jnp.float32)
    for layer in range(4):
        wgt = params[f"conv{layer + 1}_w"]
        b = params[f"conv{layer + 1}_b"]
        x = jax.lax.conv_general_dilated(
            x, wgt, (STRIDE, STRIDE), "VALID",
            dimension_numbers=("NCHW", "OIHW", "NCHW"))
        x = jnp.maximum(x + b[None, :, None, None], 0.0)
    x = x.reshape(x.shape[0], -1)
    return x @ params["fc_w"].T + params["fc_b"]


if __name__ == "__main__":
    key = jax.random.PRNGKey(0)
    key, k_params, k_x = jax.random.split(key, 3)

    image_channels = 4
    x = jax.random.normal(k_x, (2, image_channels, IMG_HW, IMG_HW), jnp.float32)

    params = init_params(k_params, image_channels)
    packed = pack_params(params, image_channels)        # one-time offline repack

    fwd = jax.jit(conv_encoder_forward)
    out = jax.block_until_ready(fwd(packed, x))
    assert out.shape == (2, conv_outDim), out.shape

    ref = jax.block_until_ready(_reference_forward(params, x))
    # bf16 weights / bf16 MXU operands (f32 accumulation) vs. an exact f32
    # reference -> 1e-2 tolerance (observed error is ~1e-3 at these magnitudes).
    np.testing.assert_allclose(np.asarray(out), np.asarray(ref), rtol=1e-2, atol=1e-2)

    print("KERNEL_OK")
</pallas_src>

<mosaic_0001>
module attributes {stable_mosaic.version = 11 : i64} {
  func.func @_fused_encoder_kernel(%arg0: i32, %arg1: memref<72x128xf32, #tpu.memory_space<vmem>>, %arg2: memref<3x128x128xbf16, #tpu.memory_space<vmem>>, %arg3: memref<1x128xf32, #tpu.memory_space<vmem>>, %arg4: memref<3x128x128xbf16, #tpu.memory_space<vmem>>, %arg5: memref<1x128xf32, #tpu.memory_space<vmem>>, %arg6: memref<3x128x128xbf16, #tpu.memory_space<vmem>>, %arg7: memref<1x128xf32, #tpu.memory_space<vmem>>, %arg8: memref<3x128x128xbf16, #tpu.memory_space<vmem>>, %arg9: memref<1x128xf32, #tpu.memory_space<vmem>>, %arg10: memref<128x128xbf16, #tpu.memory_space<vmem>>, %arg11: memref<1x128xf32, #tpu.memory_space<vmem>>, %arg12: memref<2x128xf32, #tpu.memory_space<vmem>>, %arg13: memref<40x128xf32, #tpu.memory_space<vmem>>, %arg14: memref<24x128xf32, #tpu.memory_space<vmem>>, %arg15: memref<16x128xf32, #tpu.memory_space<vmem>>, %arg16: memref<4x128xf32, #tpu.memory_space<vmem>>) attributes {dimension_semantics = [#tpu.dimension_semantics<parallel>], iteration_bounds = array<i64: 1>, scalar_prefetch = 0 : i64, scratch_operands = 4 : i64, tpu.core_type = #tpu.core_type<tc>, window_params = [{transform_indices = @transform_0, window_bounds = array<i64: 72, 128>}, {pipeline_mode = #tpu.pipeline_mode<synchronous>, transform_indices = @transform_1, window_bounds = array<i64: 3, 128, 128>}, {pipeline_mode = #tpu.pipeline_mode<synchronous>, transform_indices = @transform_2, window_bounds = array<i64: 1, 128>}, {pipeline_mode = #tpu.pipeline_mode<synchronous>, transform_indices = @transform_3, window_bounds = array<i64: 3, 128, 128>}, {pipeline_mode = #tpu.pipeline_mode<synchronous>, transform_indices = @transform_4, window_bounds = array<i64: 1, 128>}, {pipeline_mode = #tpu.pipeline_mode<synchronous>, transform_indices = @transform_5, window_bounds = array<i64: 3, 128, 128>}, {pipeline_mode = #tpu.pipeline_mode<synchronous>, transform_indices = @transform_6, window_bounds = array<i64: 1, 128>}, {pipeline_mode = #tpu.pipeline_mode<synchronous>, transform_indices = @transform_7, window_bounds = array<i64: 3, 128, 128>}, {pipeline_mode = #tpu.pipeline_mode<synchronous>, transform_indices = @transform_8, window_bounds = array<i64: 1, 128>}, {pipeline_mode = #tpu.pipeline_mode<synchronous>, transform_indices = @transform_9, window_bounds = array<i64: 128, 128>}, {pipeline_mode = #tpu.pipeline_mode<synchronous>, transform_indices = @transform_10, window_bounds = array<i64: 1, 128>}, {transform_indices = @transform_11, window_bounds = array<i64: 2, 128>}]} {
    %cst = arith.constant 0.000000e+00 : f32
    %0 = vector.broadcast %cst : f32 to vector<8x128xf32>
    %c32 = arith.constant 32 : index
    %c0 = arith.constant 0 : index
    %1 = vector.load %arg13[%c32, %c0] : memref<40x128xf32, #tpu.memory_space<vmem>>, vector<8x128xf32>
    tpu.vector_store %arg13[%c32, %c0], %0 {strides = array<i32>} : memref<40x128xf32, #tpu.memory_space<vmem>>, vector<8x128xf32>,
    %c16 = arith.constant 16 : index
    %c0_0 = arith.constant 0 : index
    %2 = vector.load %arg14[%c16, %c0_0] : memref<24x128xf32, #tpu.memory_space<vmem>>, vector<8x128xf32>
    tpu.vector_store %arg14[%c16, %c0_0], %0 {strides = array<i32>} : memref<24x128xf32, #tpu.memory_space<vmem>>, vector<8x128xf32>,
    %c8 = arith.constant 8 : index
    %c0_1 = arith.constant 0 : index
    %3 = vector.load %arg15[%c8, %c0_1] : memref<16x128xf32, #tpu.memory_space<vmem>>, vector<8x128xf32>
    tpu.vector_store %arg15[%c8, %c0_1], %0 {strides = array<i32>} : memref<16x128xf32, #tpu.memory_space<vmem>>, vector<8x128xf32>,
    %c0_2 = arith.constant 0 : index
    %c0_3 = arith.constant 0 : index
    %4 = tpu.strided_load %arg1[%c0_2, %c0_3] {strides = array<i32: 2, 1>} : memref<72x128xf32, #tpu.memory_space<vmem>>, vector<32x128xf32>
    %5 = arith.truncf %4 : vector<32x128xf32> to vector<32x128xbf16>
    %c0_4 = arith.constant 0 : index
    %c0_5 = arith.constant 0 : index
    %c0_6 = arith.constant 0 : index
    %6 = vector.load %arg2[%c0_4, %c0_5, %c0_6] : memref<3x128x128xbf16, #tpu.memory_space<vmem>>, vector<1x128x128xbf16>
    %7 = vector.shape_cast %6 : vector<1x128x128xbf16> to vector<128x128xbf16>
    %cst_7 = arith.constant dense<0.000000e+00> : vector<32x128xf32>
    %8 = tpu.matmul %5, %7, %cst_7 {dimension_numbers = #tpu.dot_dimension_numbers<[1], [0], [0], [1], [0, 0, 1, 1], [], []>} : vector<32x128xbf16>, vector<128x128xbf16>, vector<32x128xf32> -> vector<32x128xf32>
    %c1 = arith.constant 1 : index
    %c0_8 = arith.constant 0 : index
    %9 = tpu.strided_load %arg1[%c1, %c0_8] {strides = array<i32: 2, 1>} : memref<72x128xf32, #tpu.memory_space<vmem>>, vector<32x128xf32>
    %10 = arith.truncf %9 : vector<32x128xf32> to vector<32x128xbf16>
    %c1_9 = arith.constant 1 : index
    %c0_10 = arith.constant 0 : index
    %c0_11 = arith.constant 0 : index
    %11 = vector.load %arg2[%c1_9, %c0_10, %c0_11] : memref<3x128x128xbf16, #tpu.memory_space<vmem>>, vector<1x128x128xbf16>
    %12 = vector.shape_cast %11 : vector<1x128x128xbf16> to vector<128x128xbf16>
    %cst_12 = arith.constant dense<0.000000e+00> : vector<32x128xf32>
    %13 = tpu.matmul %10, %12, %cst_12 {dimension_numbers = #tpu.dot_dimension_numbers<[1], [0], [0], [1], [0, 0, 1, 1], [], []>} : vector<32x128xbf16>, vector<128x128xbf16>, vector<32x128xf32> -> vector<32x128xf32>
    %14 = arith.addf %8, %13 : vector<32x128xf32>
    %c2 = arith.constant 2 : index
    %c0_13 = arith.constant 0 : index
    %15 = tpu.strided_load %arg1[%c2, %c0_13] {strides = array<i32: 2, 1>} : memref<72x128xf32, #tpu.memory_space<vmem>>, vector<32x128xf32>
    %16 = arith.truncf %15 : vector<32x128xf32> to vector<32x128xbf16>
    %c2_14 = arith.constant 2 : index
    %c0_15 = arith.constant 0 : index
    %c0_16 = arith.constant 0 : index
    %17 = vector.load %arg2[%c2_14, %c0_15, %c0_16] : memref<3x128x128xbf16, #tpu.memory_space<vmem>>, vector<1x128x128xbf16>
    %18 = vector.shape_cast %17 : vector<1x128x128xbf16> to vector<128x128xbf16>
    %cst_17 = arith.constant dense<0.000000e+00> : vector<32x128xf32>
    %19 = tpu.matmul %16, %18, %cst_17 {dimension_numbers = #tpu.dot_dimension_numbers<[1], [0], [0], [1], [0, 0, 1, 1], [], []>} : vector<32x128xbf16>, vector<128x128xbf16>, vector<32x128xf32> -> vector<32x128xf32>
    %20 = arith.addf %14, %19 : vector<32x128xf32>
    %c0_18 = arith.constant 0 : index
    %c0_19 = arith.constant 0 : index
    %21 = vector.load %arg3[%c0_18, %c0_19] : memref<1x128xf32, #tpu.memory_space<vmem>>, vector<1x128xf32>
    %22 = vector.broadcast %21 : vector<1x128xf32> to vector<32x128xf32>
    %23 = arith.addf %20, %22 : vector<32x128xf32>
    %cst_20 = arith.constant 0.000000e+00 : f32
    %24 = vector.broadcast %cst_20 : f32 to vector<32x128xf32>
    %25 = arith.maximumf %23, %24 : vector<32x128xf32>
    %c0_21 = arith.constant 0 : index
    %c0_22 = arith.constant 0 : index
    %26 = vector.load %arg13[%c0_21, %c0_22] : memref<40x128xf32, #tpu.memory_space<vmem>>, vector<32x128xf32>
    tpu.vector_store %arg13[%c0_21, %c0_22], %25 {strides = array<i32>} : memref<40x128xf32, #tpu.memory_space<vmem>>, vector<32x128xf32>,
    %c0_23 = arith.constant 0 : index
    %c0_24 = arith.constant 0 : index
    %27 = tpu.strided_load %arg13[%c0_23, %c0_24] {strides = array<i32: 2, 1>} : memref<40x128xf32, #tpu.memory_space<vmem>>, vector<16x128xf32>
    %28 = arith.truncf %27 : vector<16x128xf32> to vector<16x128xbf16>
    %c0_25 = arith.constant 0 : index
    %c0_26 = arith.constant 0 : index
    %c0_27 = arith.constant 0 : index
    %29 = vector.load %arg4[%c0_25, %c0_26, %c0_27] : memref<3x128x128xbf16, #tpu.memory_space<vmem>>, vector<1x128x128xbf16>
    %30 = vector.shape_cast %29 : vector<1x128x128xbf16> to vector<128x128xbf16>
    %cst_28 = arith.constant dense<0.000000e+00> : vector<16x128xf32>
    %31 = tpu.matmul %28, %30, %cst_28 {dimension_numbers = #tpu.dot_dimension_numbers<[1], [0], [0], [1], [0, 0, 1, 1], [], []>} : vector<16x128xbf16>, vector<128x128xbf16>, vector<16x128xf32> -> vector<16x128xf32>
    %c1_29 = arith.constant 1 : index
    %c0_30 = arith.constant 0 : index
    %32 = tpu.strided_load %arg13[%c1_29, %c0_30] {strides = array<i32: 2, 1>} : memref<40x128xf32, #tpu.memory_space<vmem>>, vector<16x128xf32>
    %33 = arith.truncf %32 : vector<16x128xf32> to vector<16x128xbf16>
    %c1_31 = arith.constant 1 : index
    %c0_32 = arith.constant 0 : index
    %c0_33 = arith.constant 0 : index
    %34 = vector.load %arg4[%c1_31, %c0_32, %c0_33] : memref<3x128x128xbf16, #tpu.memory_space<vmem>>, vector<1x128x128xbf16>
    %35 = vector.shape_cast %34 : vector<1x128x128xbf16> to vector<128x128xbf16>
    %cst_34 = arith.constant dense<0.000000e+00> : vector<16x128xf32>
    %36 = tpu.matmul %33, %35, %cst_34 {dimension_numbers = #tpu.dot_dimension_numbers<[1], [0], [0], [1], [0, 0, 1, 1], [], []>} : vector<16x128xbf16>, vector<128x128xbf16>, vector<16x128xf32> -> vector<16x128xf32>
    %37 = arith.addf %31, %36 : vector<16x128xf32>
    %c2_35 = arith.constant 2 : index
    %c0_36 = arith.constant 0 : index
    %38 = tpu.strided_load %arg13[%c2_35, %c0_36] {strides = array<i32: 2, 1>} : memref<40x128xf32, #tpu.memory_space<vmem>>, vector<16x128xf32>
    %39 = arith.truncf %38 : vector<16x128xf32> to vector<16x128xbf16>
    %c2_37 = arith.constant 2 : index
    %c0_38 = arith.constant 0 : index
    %c0_39 = arith.constant 0 : index
    %40 = vector.load %arg4[%c2_37, %c0_38, %c0_39] : memref<3x128x128xbf16, #tpu.memory_space<vmem>>, vector<1x128x128xbf16>
    %41 = vector.shape_cast %40 : vector<1x128x128xbf16> to vector<128x128xbf16>
    %cst_40 = arith.constant dense<0.000000e+00> : vector<16x128xf32>
    %42 = tpu.matmul %39, %41, %cst_40 {dimension_numbers = #tpu.dot_dimension_numbers<[1], [0], [0], [1], [0, 0, 1, 1], [], []>} : vector<16x128xbf16>, vector<128x128xbf16>, vector<16x128xf32> -> vector<16x128xf32>
    %43 = arith.addf %37, %42 : vector<16x128xf32>
    %c0_41 = arith.constant 0 : index
    %c0_42 = arith.constant 0 : index
    %44 = vector.load %arg5[%c0_41, %c0_42] : memref<1x128xf32, #tpu.memory_space<vmem>>, vector<1x128xf32>
    %45 = vector.broadcast %44 : vector<1x128xf32> to vector<16x128xf32>
    %46 = arith.addf %43, %45 : vector<16x128xf32>
    %cst_43 = arith.constant 0.000000e+00 : f32
    %47 = vector.broadcast %cst_43 : f32 to vector<16x128xf32>
    %48 = arith.maximumf %46, %47 : vector<16x128xf32>
    %c0_44 = arith.constant 0 : index
    %c0_45 = arith.constant 0 : index
    %49 = vector.load %arg14[%c0_44, %c0_45] : memref<24x128xf32, #tpu.memory_space<vmem>>, vector<16x128xf32>
    tpu.vector_store %arg14[%c0_44, %c0_45], %48 {strides = array<i32>} : memref<24x128xf32, #tpu.memory_space<vmem>>, vector<16x128xf32>,
    %c0_46 = arith.constant 0 : index
    %c0_47 = arith.constant 0 : index
    %50 = tpu.strided_load %arg14[%c0_46, %c0_47] {strides = array<i32: 2, 1>} : memref<24x128xf32, #tpu.memory_space<vmem>>, vector<8x128xf32>
    %51 = arith.truncf %50 : vector<8x128xf32> to vector<8x128xbf16>
    %c0_48 = arith.constant 0 : index
    %c0_49 = arith.constant 0 : index
    %c0_50 = arith.constant 0 : index
    %52 = vector.load %arg6[%c0_48, %c0_49, %c0_50] : memref<3x128x128xbf16, #tpu.memory_space<vmem>>, vector<1x128x128xbf16>
    %53 = vector.shape_cast %52 : vector<1x128x128xbf16> to vector<128x128xbf16>
    %cst_51 = arith.constant dense<0.000000e+00> : vector<8x128xf32>
    %54 = tpu.matmul %51, %53, %cst_51 {dimension_numbers = #tpu.dot_dimension_numbers<[1], [0], [0], [1], [0, 0, 1, 1], [], []>} : vector<8x128xbf16>, vector<128x128xbf16>, vector<8x128xf32> -> vector<8x128xf32>
    %c1_52 = arith.constant 1 : index
    %c0_53 = arith.constant 0 : index
    %55 = tpu.strided_load %arg14[%c1_52, %c0_53] {strides = array<i32: 2, 1>} : memref<24x128xf32, #tpu.memory_space<vmem>>, vector<8x128xf32>
    %56 = arith.truncf %55 : vector<8x128xf32> to vector<8x128xbf16>
    %c1_54 = arith.constant 1 : index
    %c0_55 = arith.constant 0 : index
    %c0_56 = arith.constant 0 : index
    %57 = vector.load %arg6[%c1_54, %c0_55, %c0_56] : memref<3x128x128xbf16, #tpu.memory_space<vmem>>, vector<1x128x128xbf16>
    %58 = vector.shape_cast %57 : vector<1x128x128xbf16> to vector<128x128xbf16>
    %cst_57 = arith.constant dense<0.000000e+00> : vector<8x128xf32>
    %59 = tpu.matmul %56, %58, %cst_57 {dimension_numbers = #tpu.dot_dimension_numbers<[1], [0], [0], [1], [0, 0, 1, 1], [], []>} : vector<8x128xbf16>, vector<128x128xbf16>, vector<8x128xf32> -> vector<8x128xf32>
    %60 = arith.addf %54, %59 : vector<8x128xf32>
    %c2_58 = arith.constant 2 : index
    %c0_59 = arith.constant 0 : index
    %61 = tpu.strided_load %arg14[%c2_58, %c0_59] {strides = array<i32: 2, 1>} : memref<24x128xf32, #tpu.memory_space<vmem>>, vector<8x128xf32>
    %62 = arith.truncf %61 : vector<8x128xf32> to vector<8x128xbf16>
    %c2_60 = arith.constant 2 : index
    %c0_61 = arith.constant 0 : index
    %c0_62 = arith.constant 0 : index
    %63 = vector.load %arg6[%c2_60, %c0_61, %c0_62] : memref<3x128x128xbf16, #tpu.memory_space<vmem>>, vector<1x128x128xbf16>
    %64 = vector.shape_cast %63 : vector<1x128x128xbf16> to vector<128x128xbf16>
    %cst_63 = arith.constant dense<0.000000e+00> : vector<8x128xf32>
    %65 = tpu.matmul %62, %64, %cst_63 {dimension_numbers = #tpu.dot_dimension_numbers<[1], [0], [0], [1], [0, 0, 1, 1], [], []>} : vector<8x128xbf16>, vector<128x128xbf16>, vector<8x128xf32> -> vector<8x128xf32>
    %66 = arith.addf %60, %65 : vector<8x128xf32>
    %c0_64 = arith.constant 0 : index
    %c0_65 = arith.constant 0 : index
    %67 = vector.load %arg7[%c0_64, %c0_65] : memref<1x128xf32, #tpu.memory_space<vmem>>, vector<1x128xf32>
    %68 = vector.broadcast %67 : vector<1x128xf32> to vector<8x128xf32>
    %69 = arith.addf %66, %68 : vector<8x128xf32>
    %cst_66 = arith.constant 0.000000e+00 : f32
    %70 = vector.broadcast %cst_66 : f32 to vector<8x128xf32>
    %71 = arith.maximumf %69, %70 : vector<8x128xf32>
    %c0_67 = arith.constant 0 : index
    %c0_68 = arith.constant 0 : index
    %72 = vector.load %arg15[%c0_67, %c0_68] : memref<16x128xf32, #tpu.memory_space<vmem>>, vector<8x128xf32>
    tpu.vector_store %arg15[%c0_67, %c0_68], %71 {strides = array<i32>} : memref<16x128xf32, #tpu.memory_space<vmem>>, vector<8x128xf32>,
    %c0_69 = arith.constant 0 : index
    %c0_70 = arith.constant 0 : index
    %73 = tpu.strided_load %arg15[%c0_69, %c0_70] {strides = array<i32: 2, 1>} : memref<16x128xf32, #tpu.memory_space<vmem>>, vector<4x128xf32>
    %74 = arith.truncf %73 : vector<4x128xf32> to vector<4x128xbf16>
    %c0_71 = arith.constant 0 : index
    %c0_72 = arith.constant 0 : index
    %c0_73 = arith.constant 0 : index
    %75 = vector.load %arg8[%c0_71, %c0_72, %c0_73] : memref<3x128x128xbf16, #tpu.memory_space<vmem>>, vector<1x128x128xbf16>
    %76 = vector.shape_cast %75 : vector<1x128x128xbf16> to vector<128x128xbf16>
    %cst_74 = arith.constant dense<0.000000e+00> : vector<4x128xf32>
    %77 = tpu.matmul %74, %76, %cst_74 {dimension_numbers = #tpu.dot_dimension_numbers<[1], [0], [0], [1], [0, 0, 1, 1], [], []>} : vector<4x128xbf16>, vector<128x128xbf16>, vector<4x128xf32> -> vector<4x128xf32>
    %c1_75 = arith.constant 1 : index
    %c0_76 = arith.constant 0 : index
    %78 = tpu.strided_load %arg15[%c1_75, %c0_76] {strides = array<i32: 2, 1>} : memref<16x128xf32, #tpu.memory_space<vmem>>, vector<4x128xf32>
    %79 = arith.truncf %78 : vector<4x128xf32> to vector<4x128xbf16>
    %c1_77 = arith.constant 1 : index
    %c0_78 = arith.constant 0 : index
    %c0_79 = arith.constant 0 : index
    %80 = vector.load %arg8[%c1_77, %c0_78, %c0_79] : memref<3x128x128xbf16, #tpu.memory_space<vmem>>, vector<1x128x128xbf16>
    %81 = vector.shape_cast %80 : vector<1x128x128xbf16> to vector<128x128xbf16>
    %cst_80 = arith.constant dense<0.000000e+00> : vector<4x128xf32>
    %82 = tpu.matmul %79, %81, %cst_80 {dimension_numbers = #tpu.dot_dimension_numbers<[1], [0], [0], [1], [0, 0, 1, 1], [], []>} : vector<4x128xbf16>, vector<128x128xbf16>, vector<4x128xf32> -> vector<4x128xf32>
    %83 = arith.addf %77, %82 : vector<4x128xf32>
    %c2_81 = arith.constant 2 : index
    %c0_82 = arith.constant 0 : index
    %84 = tpu.strided_load %arg15[%c2_81, %c0_82] {strides = array<i32: 2, 1>} : memref<16x128xf32, #tpu.memory_space<vmem>>, vector<4x128xf32>
    %85 = arith.truncf %84 : vector<4x128xf32> to vector<4x128xbf16>
    %c2_83 = arith.constant 2 : index
    %c0_84 = arith.constant 0 : index
    %c0_85 = arith.constant 0 : index
    %86 = vector.load %arg8[%c2_83, %c0_84, %c0_85] : memref<3x128x128xbf16, #tpu.memory_space<vmem>>, vector<1x128x128xbf16>
    %87 = vector.shape_cast %86 : vector<1x128x128xbf16> to vector<128x128xbf16>
    %cst_86 = arith.constant dense<0.000000e+00> : vector<4x128xf32>
    %88 = tpu.matmul %85, %87, %cst_86 {dimension_numbers = #tpu.dot_dimension_numbers<[1], [0], [0], [1], [0, 0, 1, 1], [], []>} : vector<4x128xbf16>, vector<128x128xbf16>, vector<4x128xf32> -> vector<4x128xf32>
    %89 = arith.addf %83, %88 : vector<4x128xf32>
    %c0_87 = arith.constant 0 : index
    %c0_88 = arith.constant 0 : index
    %90 = vector.load %arg9[%c0_87, %c0_88] : memref<1x128xf32, #tpu.memory_space<vmem>>, vector<1x128xf32>
    %91 = vector.broadcast %90 : vector<1x128xf32> to vector<4x128xf32>
    %92 = arith.addf %89, %91 : vector<4x128xf32>
    %cst_89 = arith.constant 0.000000e+00 : f32
    %93 = vector.broadcast %cst_89 : f32 to vector<4x128xf32>
    %94 = arith.maximumf %92, %93 : vector<4x128xf32>
    %c0_90 = arith.constant 0 : index
    %c0_91 = arith.constant 0 : index
    %95 = vector.load %arg16[%c0_90, %c0_91] : memref<4x128xf32, #tpu.memory_space<vmem>>, vector<4x128xf32>
    tpu.vector_store %arg16[%c0_90, %c0_91], %94 {strides = array<i32>} : memref<4x128xf32, #tpu.memory_space<vmem>>, vector<4x128xf32>,
    %c0_92 = arith.constant 0 : index
    %c0_93 = arith.constant 0 : index
    %96 = tpu.strided_load %arg16[%c0_92, %c0_93] {strides = array<i32: 2, 1>} : memref<4x128xf32, #tpu.memory_space<vmem>>, vector<2x128xf32>
    %97 = arith.truncf %96 : vector<2x128xf32> to vector<2x128xbf16>
    %c0_94 = arith.constant 0 : index
    %c0_95 = arith.constant 0 : index
    %98 = vector.load %arg10[%c0_94, %c0_95] : memref<128x128xbf16, #tpu.memory_space<vmem>>, vector<128x128xbf16>
    %cst_96 = arith.constant dense<0.000000e+00> : vector<2x128xf32>
    %99 = tpu.matmul %97, %98, %cst_96 {dimension_numbers = #tpu.dot_dimension_numbers<[1], [0], [0], [1], [0, 0, 1, 1], [], []>} : vector<2x128xbf16>, vector<128x128xbf16>, vector<2x128xf32> -> vector<2x128xf32>
    %c0_97 = arith.constant 0 : index
    %c0_98 = arith.constant 0 : index
    %100 = vector.load %arg11[%c0_97, %c0_98] : memref<1x128xf32, #tpu.memory_space<vmem>>, vector<1x128xf32>
    %101 = vector.broadcast %100 : vector<1x128xf32> to vector<2x128xf32>
    %102 = arith.addf %99, %101 : vector<2x128xf32>
    %c0_99 = arith.constant 0 : index
    %c0_100 = arith.constant 0 : index
    %103 = vector.load %arg12[%c0_99, %c0_100] : memref<2x128xf32, #tpu.memory_space<vmem>>, vector<2x128xf32>
    tpu.vector_store %arg12[%c0_99, %c0_100], %102 {strides = array<i32>} : memref<2x128xf32, #tpu.memory_space<vmem>>, vector<2x128xf32>,
    return
  }
  func.func @transform_0(%arg0: i32) -> (i32, i32) {
    %c0_i32 = arith.constant 0 : i32
    %c0_i32_0 = arith.constant 0 : i32
    return %arg0, %c0_i32 : i32, i32
  }
  func.func @transform_1(%arg0: i32) -> (i32, i32, i32) {
    %c0_i32 = arith.constant 0 : i32
    %c0_i32_0 = arith.constant 0 : i32
    %c0_i32_1 = arith.constant 0 : i32
    %c0_i32_2 = arith.constant 0 : i32
    return %c0_i32, %c0_i32_0, %c0_i32_1 : i32, i32, i32
  }
  func.func @transform_2(%arg0: i32) -> (i32, i32) {
    %c0_i32 = arith.constant 0 : i32
    %c0_i32_0 = arith.constant 0 : i32
    %c0_i32_1 = arith.constant 0 : i32
    return %c0_i32, %c0_i32_0 : i32, i32
  }
  func.func @transform_3(%arg0: i32) -> (i32, i32, i32) {
    %c0_i32 = arith.constant 0 : i32
    %c0_i32_0 = arith.constant 0 : i32
    %c0_i32_1 = arith.constant 0 : i32
    %c0_i32_2 = arith.constant 0 : i32
    return %c0_i32, %c0_i32_0, %c0_i32_1 : i32, i32, i32
  }
  func.func @transform_4(%arg0: i32) -> (i32, i32) {
    %c0_i32 = arith.constant 0 : i32
    %c0_i32_0 = arith.constant 0 : i32
    %c0_i32_1 = arith.constant 0 : i32
    return %c0_i32, %c0_i32_0 : i32, i32
  }
  func.func @transform_5(%arg0: i32) -> (i32, i32, i32) {
    %c0_i32 = arith.constant 0 : i32
    %c0_i32_0 = arith.constant 0 : i32
    %c0_i32_1 = arith.constant 0 : i32
    %c0_i32_2 = arith.constant 0 : i32
    return %c0_i32, %c0_i32_0, %c0_i32_1 : i32, i32, i32
  }
  func.func @transform_6(%arg0: i32) -> (i32, i32) {
    %c0_i32 = arith.constant 0 : i32
    %c0_i32_0 = arith.constant 0 : i32
    %c0_i32_1 = arith.constant 0 : i32
    return %c0_i32, %c0_i32_0 : i32, i32
  }
  func.func @transform_7(%arg0: i32) -> (i32, i32, i32) {
    %c0_i32 = arith.constant 0 : i32
    %c0_i32_0 = arith.constant 0 : i32
    %c0_i32_1 = arith.constant 0 : i32
    %c0_i32_2 = arith.constant 0 : i32
    return %c0_i32, %c0_i32_0, %c0_i32_1 : i32, i32, i32
  }
  func.func @transform_8(%arg0: i32) -> (i32, i32) {
    %c0_i32 = arith.constant 0 : i32
    %c0_i32_0 = arith.constant 0 : i32
    %c0_i32_1 = arith.constant 0 : i32
    return %c0_i32, %c0_i32_0 : i32, i32
  }
  func.func @transform_9(%arg0: i32) -> (i32, i32) {
    %c0_i32 = arith.constant 0 : i32
    %c0_i32_0 = arith.constant 0 : i32
    %c0_i32_1 = arith.constant 0 : i32
    return %c0_i32, %c0_i32_0 : i32, i32
  }
  func.func @transform_10(%arg0: i32) -> (i32, i32) {
    %c0_i32 = arith.constant 0 : i32
    %c0_i32_0 = arith.constant 0 : i32
    %c0_i32_1 = arith.constant 0 : i32
    return %c0_i32, %c0_i32_0 : i32, i32
  }
  func.func @transform_11(%arg0: i32) -> (i32, i32) {
    %c0_i32 = arith.constant 0 : i32
    %c0_i32_0 = arith.constant 0 : i32
    return %arg0, %c0_i32 : i32, i32
  }
}

</mosaic_0001>

<llo_original>
// kernel: conv_encoder_forward.1
$region0: #{conv_encoder_forward.1}
  #allocation0 [shape = 'u32[]', space=smem, size = 0x4, offset = 0x4, fixed_abs, tag = 'smem constant byte address 0x4 - core index']
  #allocation1 [shape = 'u32[144,128]{1,0:T(1,128)}', space=vmem, size = 0x12000, scoped, tag = 'internal scratch']
  #allocation2 [shape = 'f32[40,128]{1,0:T(8,128)}', space=vmem, size = 0x5000, scoped, tag = 'scratch operand']
  #allocation3 [shape = 'f32[24,128]{1,0:T(8,128)}', space=vmem, size = 0x3000, scoped, tag = 'scratch operand']
  #allocation4 [shape = 'f32[16,128]{1,0:T(8,128)}', space=vmem, size = 0x2000, scoped, tag = 'scratch operand']
  #allocation5 [shape = 'f32[4,128]{1,0:T(4,128)}', space=vmem, size = 0x800, scoped, tag = 'scratch operand']
  %s0 = inlined_call_operand.vmem [shape: f32[72,128], index: 0, kind: input, shape index: {}]
  %s1 = inlined_call_operand.vmem [shape: bf16[3,128,128], index: 1, kind: input, shape index: {}]
  %s2 = inlined_call_operand.vmem [shape: f32[1,128], index: 2, kind: input, shape index: {}]
  %s3 = inlined_call_operand.vmem [shape: bf16[3,128,128], index: 3, kind: input, shape index: {}]
  %s4 = inlined_call_operand.vmem [shape: f32[1,128], index: 4, kind: input, shape index: {}]
  %s5 = inlined_call_operand.vmem [shape: bf16[3,128,128], index: 5, kind: input, shape index: {}]
  %s6 = inlined_call_operand.vmem [shape: f32[1,128], index: 6, kind: input, shape index: {}]
  %s7 = inlined_call_operand.vmem [shape: bf16[3,128,128], index: 7, kind: input, shape index: {}]
  %s8 = inlined_call_operand.vmem [shape: f32[1,128], index: 8, kind: input, shape index: {}]
  %s9 = inlined_call_operand.vmem [shape: bf16[128,128], index: 9, kind: input, shape index: {}]
  %s10 = inlined_call_operand.vmem [shape: f32[1,128], index: 10, kind: input, shape index: {}]
  %s11 = inlined_call_operand.hbm [shape: f32[2,128], index: 11, kind: output, shape index: {}]
  %s12 = sld [smem:[#allocation0]]
  $region54: #{conv_encoder_forward.1} parent=0
    _
  %s14 = ssub.s32 1, %s12
  %s15 = scalar_select 0, %s14, %s12
  $region1: #{conv_encoder_forward.1} parent=0
    #allocation6 [shape = 'u8[1024]{0}', space=vmem, size = 0x400, scoped, tag = 'output window, operand 0, single buffered']
    #allocation7 [shape = 's32[1]{0}', space=sflag, size = 0x4, scoped, tag = 'scoped memory for conv_encoder_forward.1']
    %16 = vsyncpa [#allocation7], 0
    // Predicated region
    $region2: #{conv_encoder_forward.1} parent=1 // pred_check
      _
    $region3: #{conv_encoder_forward.1} parent=1 // pred_check_branch
      %18 = sbr.rel (0) target = $region5
    $region4: #{conv_encoder_forward.1} parent=1 // pred_region
      _
    $region5: #{conv_encoder_forward.1} parent=1 // pred_fallthru
      _
    // Predicated region
    $region6: #{conv_encoder_forward.1} parent=1 // pred_check
      _
    $region7: #{conv_encoder_forward.1} parent=1 // pred_check_branch
      %20 = sbr.rel (0) target = $region9
    $region8: #{conv_encoder_forward.1} parent=1 // pred_region
      _
    $region9: #{conv_encoder_forward.1} parent=1 // pred_fallthru
      _
    // Predicated region
    $region10: #{conv_encoder_forward.1} parent=1 // pred_check
      _
    $region11: #{conv_encoder_forward.1} parent=1 // pred_check_branch
      %22 = sbr.rel (0) target = $region13
    $region12: #{conv_encoder_forward.1} parent=1 // pred_region
      _
    $region13: #{conv_encoder_forward.1} parent=1 // pred_fallthru
      _
    // Predicated region
    $region14: #{conv_encoder_forward.1} parent=1 // pred_check
      _
    $region15: #{conv_encoder_forward.1} parent=1 // pred_check_branch
      %24 = sbr.rel (0) target = $region17
    $region16: #{conv_encoder_forward.1} parent=1 // pred_region
      _
    $region17: #{conv_encoder_forward.1} parent=1 // pred_fallthru
      _
    // Predicated region
    $region18: #{conv_encoder_forward.1} parent=1 // pred_check
      _
    $region19: #{conv_encoder_forward.1} parent=1 // pred_check_branch
      %26 = sbr.rel (0) target = $region21
    $region20: #{conv_encoder_forward.1} parent=1 // pred_region
      _
    $region21: #{conv_encoder_forward.1} parent=1 // pred_fallthru
      _
    // Predicated region
    $region22: #{conv_encoder_forward.1} parent=1 // pred_check
      _
    $region23: #{conv_encoder_forward.1} parent=1 // pred_check_branch
      %28 = sbr.rel (0) target = $region25
    $region24: #{conv_encoder_forward.1} parent=1 // pred_region
      _
    $region25: #{conv_encoder_forward.1} parent=1 // pred_fallthru
      _
    // Predicated region
    $region26: #{conv_encoder_forward.1} parent=1 // pred_check
      _
    $region27: #{conv_encoder_forward.1} parent=1 // pred_check_branch
      %30 = sbr.rel (0) target = $region29
    $region28: #{conv_encoder_forward.1} parent=1 // pred_region
      _
    $region29: #{conv_encoder_forward.1} parent=1 // pred_fallthru
      _
    // Predicated region
    $region30: #{conv_encoder_forward.1} parent=1 // pred_check
      _
    $region31: #{conv_encoder_forward.1} parent=1 // pred_check_branch
      %32 = sbr.rel (0) target = $region33
    $region32: #{conv_encoder_forward.1} parent=1 // pred_region
      _
    $region33: #{conv_encoder_forward.1} parent=1 // pred_fallthru
      _
    // Predicated region
    $region34: #{conv_encoder_forward.1} parent=1 // pred_check
      _
    $region35: #{conv_encoder_forward.1} parent=1 // pred_check_branch
      %34 = sbr.rel (0) target = $region37
    $region36: #{conv_encoder_forward.1} parent=1 // pred_region
      _
    $region37: #{conv_encoder_forward.1} parent=1 // pred_fallthru
      _
    // Predicated region
    $region38: #{conv_encoder_forward.1} parent=1 // pred_check
      _
    $region39: #{conv_encoder_forward.1} parent=1 // pred_check_branch
      %36 = sbr.rel (0) target = $region41
    $region40: #{conv_encoder_forward.1} parent=1 // pred_region
      _
    $region41: #{conv_encoder_forward.1} parent=1 // pred_fallthru
      _
    // Predicated region
    $region42: #{conv_encoder_forward.1} parent=1 // pred_check
      _
    $region43: #{conv_encoder_forward.1} parent=1 // pred_check_branch
      %38 = sbr.rel (0) target = $region45
    $region44: #{conv_encoder_forward.1} parent=1 // pred_region
      _
    $region45: #{conv_encoder_forward.1} parent=1 // pred_fallthru
      _
    %40 = vst [vmem:[#allocation2 + $0x20] sm:$0xff] 0.0
    %41 = vst [vmem:[#allocation3 + $0x10] sm:$0xff] 0.0
    %42 = vst [vmem:[#allocation4 + $0x8] sm:$0xff] 0.0
    %v43 = vld [vmem:[%s0] ss:$2 sm:$0xff]
    %s44 = scalar_lea.vmem %s0, 16
    %v45 = vld [vmem:[%s44] ss:$2 sm:$0xff]
    %s46 = scalar_lea.vmem %s0, 32
    %v47 = vld [vmem:[%s46] ss:$2 sm:$0xff]
    %s48 = scalar_lea.vmem %s0, 48
    %v49 = vld [vmem:[%s48] ss:$2 sm:$0xff]
    %v50 = vpack.c.bf16 %v45, %v43
    %v51 = vpack.c.bf16 %v49, %v47
    %v52 = vld [vmem:[%s1] sm:$0xf]
    %v53 = vld [vmem:[%s1 + $0x4] sm:$0xf]
    %v54 = vld [vmem:[%s1 + $0x8] sm:$0xf]
    %v55 = vld [vmem:[%s1 + $0xc] sm:$0xf]
    %v56 = vld [vmem:[%s1 + $0x10] sm:$0xf]
    %v57 = vld [vmem:[%s1 + $0x14] sm:$0xf]
    %v58 = vld [vmem:[%s1 + $0x18] sm:$0xf]
    %v59 = vld [vmem:[%s1 + $0x1c] sm:$0xf]
    %v60 = vld [vmem:[%s1 + $0x20] sm:$0xf]
    %v61 = vld [vmem:[%s1 + $0x24] sm:$0xf]
    %v62 = vld [vmem:[%s1 + $0x28] sm:$0xf]
    %v63 = vld [vmem:[%s1 + $0x2c] sm:$0xf]
    %v64 = vld [vmem:[%s1 + $0x30] sm:$0xf]
    %v65 = vld [vmem:[%s1 + $0x34] sm:$0xf]
    %v66 = vld [vmem:[%s1 + $0x38] sm:$0xf]
    %v67 = vld [vmem:[%s1 + $0x3c] sm:$0xf]
    %s68 = scalar_lea.vmem %s0, 1
    %v69 = vld [vmem:[%s68] ss:$2 sm:$0xff]
    %s70 = scalar_lea.vmem %s0, 17
    %v71 = vld [vmem:[%s70] ss:$2 sm:$0xff]
    %s72 = scalar_lea.vmem %s0, 33
    %v73 = vld [vmem:[%s72] ss:$2 sm:$0xff]
    %s74 = scalar_lea.vmem %s0, 49
    %v75 = vld [vmem:[%s74] ss:$2 sm:$0xff]
    %v76 = vpack.c.bf16 %v71, %v69
    %v77 = vpack.c.bf16 %v75, %v73
    %s78 = scalar_lea.vmem %s1, 64
    %v79 = vld [vmem:[%s78] sm:$0xf]
    %v80 = vld [vmem:[%s78 + $0x4] sm:$0xf]
    %v81 = vld [vmem:[%s78 + $0x8] sm:$0xf]
    %v82 = vld [vmem:[%s78 + $0xc] sm:$0xf]
    %v83 = vld [vmem:[%s78 + $0x10] sm:$0xf]
    %v84 = vld [vmem:[%s78 + $0x14] sm:$0xf]
    %v85 = vld [vmem:[%s78 + $0x18] sm:$0xf]
    %v86 = vld [vmem:[%s78 + $0x1c] sm:$0xf]
    %v87 = vld [vmem:[%s78 + $0x20] sm:$0xf]
    %v88 = vld [vmem:[%s78 + $0x24] sm:$0xf]
    %v89 = vld [vmem:[%s78 + $0x28] sm:$0xf]
    %v90 = vld [vmem:[%s78 + $0x2c] sm:$0xf]
    %v91 = vld [vmem:[%s78 + $0x30] sm:$0xf]
    %v92 = vld [vmem:[%s78 + $0x34] sm:$0xf]
    %v93 = vld [vmem:[%s78 + $0x38] sm:$0xf]
    %v94 = vld [vmem:[%s78 + $0x3c] sm:$0xf]
    %v111 = vunpack.c.l.b16 %v79
    %v112 = vunpack.c.l.b16 %v80
    %v113 = vunpack.c.l.b16 %v81
    %v114 = vunpack.c.l.b16 %v82
    %v115 = vunpack.c.l.b16 %v83
    %v116 = vunpack.c.l.b16 %v84
    %v117 = vunpack.c.l.b16 %v85
    %v118 = vunpack.c.l.b16 %v86
    %v119 = vunpack.c.l.b16 %v87
    %v120 = vunpack.c.l.b16 %v88
    %v121 = vunpack.c.l.b16 %v89
    %v122 = vunpack.c.l.b16 %v90
    %v123 = vunpack.c.l.b16 %v91
    %v124 = vunpack.c.l.b16 %v92
    %v125 = vunpack.c.l.b16 %v93
    %v126 = vunpack.c.l.b16 %v94
    %v127 = vpack.c.b16 %v112, %v111
    %v128 = vpack.c.b16 %v114, %v113
    %v129 = vpack.c.b16 %v116, %v115
    %v130 = vpack.c.b16 %v118, %v117
    %v131 = vpack.c.b16 %v120, %v119
    %v132 = vpack.c.b16 %v122, %v121
    %v133 = vpack.c.b16 %v124, %v123
    %v134 = vpack.c.b16 %v126, %v125
    %143 = vmatprep.subr.bf16.mxu0 0
    %144 = vmatpush1.bf16.msra.mxu0 %v127
    %145 = vmatprep.subr.bf16.mxu0 0
    %146 = vmatpush1.bf16.msra.mxu0 %v128
    %147 = vmatprep.subr.bf16.mxu0 0
    %148 = vmatpush1.bf16.msra.mxu0 %v129
    %149 = vmatprep.subr.bf16.mxu0 0
    %150 = vmatpush1.bf16.msra.mxu0 %v130
    %151 = vmatprep.subr.bf16.mxu0 0
    %152 = vmatpush1.bf16.msra.mxu0 %v131
    %153 = vmatprep.subr.bf16.mxu0 0
    %154 = vmatpush1.bf16.msra.mxu0 %v132
    %155 = vmatprep.subr.bf16.mxu0 0
    %156 = vmatpush1.bf16.msra.mxu0 %v133
    %157 = vmatprep.subr.bf16.mxu0 0
    %158 = vmatpush1.bf16.msra.mxu0 %v134
    %159 = vmatprep.subr.bf16.mxu0 0
    %160 = vmatpush1.bf16.msra.mxu0 0
    %161 = vmatprep.subr.bf16.mxu0 0
    %162 = vmatpush1.bf16.msra.mxu0 0
    %163 = vmatprep.subr.bf16.mxu0 0
    %164 = vmatpush1.bf16.msra.mxu0 0
    %165 = vmatprep.subr.bf16.mxu0 0
    %166 = vmatpush1.bf16.msra.mxu0 0
    %167 = vmatprep.subr.bf16.mxu0 0
    %168 = vmatpush1.bf16.msra.mxu0 0
    %169 = vmatprep.subr.bf16.mxu0 0
    %170 = vmatpush1.bf16.msra.mxu0 0
    %171 = vmatprep.subr.bf16.mxu0 0
    %172 = vmatpush1.bf16.msra.mxu0 0
    %173 = vmatprep.subr.bf16.mxu0 0
    %174 = vmatpush1.bf16.msra.mxu0 0
    %175 = vmatprep.mubr.bf16.mxu0 0
    %176 = vmatmul.mubr.bf16.gmra.mrb[0].mxu0 %v76
    %v177 = vpop.f32.mrb[0].mxu0
    %v178 = vadd.f32 0.0, %v177
    %v179 = vpop.f32.mrb[0].mxu0
    %v180 = vpop.f32.mrb[0].mxu0
    %v181 = vadd.f32 0.0, %v180
    %v182 = vpop.f32.mrb[0].mxu0
    %183 = vmatprep.mubr.bf16.mxu0 0
    %184 = vmatmul.mubr.bf16.gmra.mrb[0].mxu0 %v77
    %v185 = vpop.f32.mrb[0].mxu0
    %v186 = vadd.f32 0.0, %v185
    %v187 = vpop.f32.mrb[0].mxu0
    %v188 = vpop.f32.mrb[0].mxu0
    %v189 = vadd.f32 0.0, %v188
    %v190 = vpop.f32.mrb[0].mxu0
    %191 = vdwg.mxu0
    %v208 = vunpack.c.l.b16 %v52
    %v209 = vunpack.c.l.b16 %v53
    %v210 = vunpack.c.l.b16 %v54
    %v211 = vunpack.c.l.b16 %v55
    %v212 = vunpack.c.l.b16 %v56
    %v213 = vunpack.c.l.b16 %v57
    %v214 = vunpack.c.l.b16 %v58
    %v215 = vunpack.c.l.b16 %v59
    %v216 = vunpack.c.l.b16 %v60
    %v217 = vunpack.c.l.b16 %v61
    %v218 = vunpack.c.l.b16 %v62
    %v219 = vunpack.c.l.b16 %v63
    %v220 = vunpack.c.l.b16 %v64
    %v221 = vunpack.c.l.b16 %v65
    %v222 = vunpack.c.l.b16 %v66
    %v223 = vunpack.c.l.b16 %v67
    %v224 = vpack.c.b16 %v209, %v208
    %v225 = vpack.c.b16 %v211, %v210
    %v226 = vpack.c.b16 %v213, %v212
    %v227 = vpack.c.b16 %v215, %v214
    %v228 = vpack.c.b16 %v217, %v216
    %v229 = vpack.c.b16 %v219, %v218
    %v230 = vpack.c.b16 %v221, %v220
    %v231 = vpack.c.b16 %v223, %v222
    %240 = vmatprep.subr.bf16.mxu0 0
    %241 = vmatpush1.bf16.msra.mxu0 %v224
    %242 = vmatprep.subr.bf16.mxu0 0
    %243 = vmatpush1.bf16.msra.mxu0 %v225
    %244 = vmatprep.subr.bf16.mxu0 0
    %245 = vmatpush1.bf16.msra.mxu0 %v226
    %246 = vmatprep.subr.bf16.mxu0 0
    %247 = vmatpush1.bf16.msra.mxu0 %v227
    %248 = vmatprep.subr.bf16.mxu0 0
    %249 = vmatpush1.bf16.msra.mxu0 %v228
    %250 = vmatprep.subr.bf16.mxu0 0
    %251 = vmatpush1.bf16.msra.mxu0 %v229
    %252 = vmatprep.subr.bf16.mxu0 0
    %253 = vmatpush1.bf16.msra.mxu0 %v230
    %254 = vmatprep.subr.bf16.mxu0 0
    %255 = vmatpush1.bf16.msra.mxu0 %v231
    %256 = vmatprep.subr.bf16.mxu0 0
    %257 = vmatpush1.bf16.msra.mxu0 0
    %258 = vmatprep.subr.bf16.mxu0 0
    %259 = vmatpush1.bf16.msra.mxu0 0
    %260 = vmatprep.subr.bf16.mxu0 0
    %261 = vmatpush1.bf16.msra.mxu0 0
    %262 = vmatprep.subr.bf16.mxu0 0
    %263 = vmatpush1.bf16.msra.mxu0 0
    %264 = vmatprep.subr.bf16.mxu0 0
    %265 = vmatpush1.bf16.msra.mxu0 0
    %266 = vmatprep.subr.bf16.mxu0 0
    %267 = vmatpush1.bf16.msra.mxu0 0
    %268 = vmatprep.subr.bf16.mxu0 0
    %269 = vmatpush1.bf16.msra.mxu0 0
    %270 = vmatprep.subr.bf16.mxu0 0
    %271 = vmatpush1.bf16.msra.mxu0 0
    %272 = vmatprep.mubr.bf16.mxu0 0
    %273 = vmatmul.mubr.bf16.gmra.mrb[0].mxu0 %v50
    %v274 = vpop.f32.mrb[0].mxu0
    %v275 = vadd.f32 %v178, %v274
    %v276 = vpop.f32.mrb[0].mxu0
    %v277 = vpop.f32.mrb[0].mxu0
    %v278 = vadd.f32 %v181, %v277
    %v279 = vpop.f32.mrb[0].mxu0
    %280 = vmatprep.mubr.bf16.mxu0 0
    %281 = vmatmul.mubr.bf16.gmra.mrb[0].mxu0 %v51
    %v282 = vpop.f32.mrb[0].mxu0
    %v283 = vadd.f32 %v186, %v282
    %v284 = vpop.f32.mrb[0].mxu0
    %v285 = vpop.f32.mrb[0].mxu0
    %v286 = vadd.f32 %v189, %v285
    %v287 = vpop.f32.mrb[0].mxu0
    %288 = vdwg.mxu0
    %s289 = scalar_lea.vmem %s0, 2
    %v290 = vld [vmem:[%s289] ss:$2 sm:$0xff]
    %s291 = scalar_lea.vmem %s0, 18
    %v292 = vld [vmem:[%s291] ss:$2 sm:$0xff]
    %s293 = scalar_lea.vmem %s0, 34
    %v294 = vld [vmem:[%s293] ss:$2 sm:$0xff]
    %s295 = scalar_lea.vmem %s0, 50
    %v296 = vld [vmem:[%s295] ss:$2 sm:$0xff]
    %v297 = vpack.c.bf16 %v292, %v290
    %v298 = vpack.c.bf16 %v296, %v294
    %s299 = scalar_lea.vmem %s1, 128
    %v300 = vld [vmem:[%s299] sm:$0xf]
    %v301 = vld [vmem:[%s299 + $0x4] sm:$0xf]
    %v302 = vld [vmem:[%s299 + $0x8] sm:$0xf]
    %v303 = vld [vmem:[%s299 + $0xc] sm:$0xf]
    %v304 = vld [vmem:[%s299 + $0x10] sm:$0xf]
    %v305 = vld [vmem:[%s299 + $0x14] sm:$0xf]
    %v306 = vld [vmem:[%s299 + $0x18] sm:$0xf]
    %v307 = vld [vmem:[%s299 + $0x1c] sm:$0xf]
    %v308 = vld [vmem:[%s299 + $0x20] sm:$0xf]
    %v309 = vld [vmem:[%s299 + $0x24] sm:$0xf]
    %v310 = vld [vmem:[%s299 + $0x28] sm:$0xf]
    %v311 = vld [vmem:[%s299 + $0x2c] sm:$0xf]
    %v312 = vld [vmem:[%s299 + $0x30] sm:$0xf]
    %v313 = vld [vmem:[%s299 + $0x34] sm:$0xf]
    %v314 = vld [vmem:[%s299 + $0x38] sm:$0xf]
    %v315 = vld [vmem:[%s299 + $0x3c] sm:$0xf]
    %v332 = vunpack.c.l.b16 %v300
    %v333 = vunpack.c.l.b16 %v301
    %v334 = vunpack.c.l.b16 %v302
    %v335 = vunpack.c.l.b16 %v303
    %v336 = vunpack.c.l.b16 %v304
    %v337 = vunpack.c.l.b16 %v305
    %v338 = vunpack.c.l.b16 %v306
    %v339 = vunpack.c.l.b16 %v307
    %v340 = vunpack.c.l.b16 %v308
    %v341 = vunpack.c.l.b16 %v309
    %v342 = vunpack.c.l.b16 %v310
    %v343 = vunpack.c.l.b16 %v311
    %v344 = vunpack.c.l.b16 %v312
    %v345 = vunpack.c.l.b16 %v313
    %v346 = vunpack.c.l.b16 %v314
    %v347 = vunpack.c.l.b16 %v315
    %v348 = vpack.c.b16 %v333, %v332
    %v349 = vpack.c.b16 %v335, %v334
    %v350 = vpack.c.b16 %v337, %v336
    %v351 = vpack.c.b16 %v339, %v338
    %v352 = vpack.c.b16 %v341, %v340
    %v353 = vpack.c.b16 %v343, %v342
    %v354 = vpack.c.b16 %v345, %v344
    %v355 = vpack.c.b16 %v347, %v346
    %364 = vmatprep.subr.bf16.mxu0 0
    %365 = vmatpush1.bf16.msra.mxu0 %v348
    %366 = vmatprep.subr.bf16.mxu0 0
    %367 = vmatpush1.bf16.msra.mxu0 %v349
    %368 = vmatprep.subr.bf16.mxu0 0
    %369 = vmatpush1.bf16.msra.mxu0 %v350
    %370 = vmatprep.subr.bf16.mxu0 0
    %371 = vmatpush1.bf16.msra.mxu0 %v351
    %372 = vmatprep.subr.bf16.mxu0 0
    %373 = vmatpush1.bf16.msra.mxu0 %v352
    %374 = vmatprep.subr.bf16.mxu0 0
    %375 = vmatpush1.bf16.msra.mxu0 %v353
    %376 = vmatprep.subr.bf16.mxu0 0
    %377 = vmatpush1.bf16.msra.mxu0 %v354
    %378 = vmatprep.subr.bf16.mxu0 0
    %379 = vmatpush1.bf16.msra.mxu0 %v355
    %380 = vmatprep.subr.bf16.mxu0 0
    %381 = vmatpush1.bf16.msra.mxu0 0
    %382 = vmatprep.subr.bf16.mxu0 0
    %383 = vmatpush1.bf16.msra.mxu0 0
    %384 = vmatprep.subr.bf16.mxu0 0
    %385 = vmatpush1.bf16.msra.mxu0 0
    %386 = vmatprep.subr.bf16.mxu0 0
    %387 = vmatpush1.bf16.msra.mxu0 0
    %388 = vmatprep.subr.bf16.mxu0 0
    %389 = vmatpush1.bf16.msra.mxu0 0
    %390 = vmatprep.subr.bf16.mxu0 0
    %391 = vmatpush1.bf16.msra.mxu0 0
    %392 = vmatprep.subr.bf16.mxu0 0
    %393 = vmatpush1.bf16.msra.mxu0 0
    %394 = vmatprep.subr.bf16.mxu0 0
    %395 = vmatpush1.bf16.msra.mxu0 0
    %396 = vmatprep.mubr.bf16.mxu0 0
    %397 = vmatmul.mubr.bf16.gmra.mrb[0].mxu0 %v297
    %v398 = vpop.f32.mrb[0].mxu0
    %v399 = vadd.f32 0.0, %v398
    %v400 = vpop.f32.mrb[0].mxu0
    %v401 = vpop.f32.mrb[0].mxu0
    %v402 = vadd.f32 0.0, %v401
    %v403 = vpop.f32.mrb[0].mxu0
    %404 = vmatprep.mubr.bf16.mxu0 0
    %405 = vmatmul.mubr.bf16.gmra.mrb[0].mxu0 %v298
    %v406 = vpop.f32.mrb[0].mxu0
    %v407 = vadd.f32 0.0, %v406
    %v408 = vpop.f32.mrb[0].mxu0
    %v409 = vpop.f32.mrb[0].mxu0
    %v410 = vadd.f32 0.0, %v409
    %v411 = vpop.f32.mrb[0].mxu0
    %412 = vdwg.mxu0
    %v413 = vadd.f32 %v275, %v399
    %v414 = vadd.f32 %v278, %v402
    %v415 = vadd.f32 %v283, %v407
    %v416 = vadd.f32 %v286, %v410
    %v417 = vld [vmem:[%s2] sm:$0x1]
    %v419 = vlaneseq
    %v420 = vshrl.u32 %v419, 7
    %v421 = vsub.s32 0, %v420
    %v422 = vrot.slane %v417, %v421
    %v424 = vadd.f32 %v413, %v422
    %v425 = vadd.f32 %v414, %v422
    %v426 = vadd.f32 %v415, %v422
    %v427 = vadd.f32 %v416, %v422
    %v428 = vmax.f32 %v424, 0.0
    %v429 = vmax.f32 %v425, 0.0
    %v430 = vmax.f32 %v426, 0.0
    %v431 = vmax.f32 %v427, 0.0
    %432 = vst [vmem:[#allocation2] sm:$0xff] %v428
    %433 = vst [vmem:[#allocation2 + $0x8] sm:$0xff] %v429
    %434 = vst [vmem:[#allocation2 + $0x10] sm:$0xff] %v430
    %435 = vst [vmem:[#allocation2 + $0x18] sm:$0xff] %v431
    %v436 = vld [vmem:[#allocation2] ss:$2 sm:$0xff]
    %s437 = scalar_lea.vmem [#allocation2], 16
    %v438 = vld [vmem:[%s437] ss:$2 sm:$0xff]
    %v439 = vpack.c.bf16 %v438, %v436
    %v440 = vld [vmem:[%s3] sm:$0xf]
    %v441 = vld [vmem:[%s3 + $0x4] sm:$0xf]
    %v442 = vld [vmem:[%s3 + $0x8] sm:$0xf]
    %v443 = vld [vmem:[%s3 + $0xc] sm:$0xf]
    %v444 = vld [vmem:[%s3 + $0x10] sm:$0xf]
    %v445 = vld [vmem:[%s3 + $0x14] sm:$0xf]
    %v446 = vld [vmem:[%s3 + $0x18] sm:$0xf]
    %v447 = vld [vmem:[%s3 + $0x1c] sm:$0xf]
    %v448 = vld [vmem:[%s3 + $0x20] sm:$0xf]
    %v449 = vld [vmem:[%s3 + $0x24] sm:$0xf]
    %v450 = vld [vmem:[%s3 + $0x28] sm:$0xf]
    %v451 = vld [vmem:[%s3 + $0x2c] sm:$0xf]
    %v452 = vld [vmem:[%s3 + $0x30] sm:$0xf]
    %v453 = vld [vmem:[%s3 + $0x34] sm:$0xf]
    %v454 = vld [vmem:[%s3 + $0x38] sm:$0xf]
    %v455 = vld [vmem:[%s3 + $0x3c] sm:$0xf]
    %s456 = scalar_lea.vmem [#allocation2], 1
    %v457 = vld [vmem:[%s456] ss:$2 sm:$0xff]
    %s458 = scalar_lea.vmem [#allocation2], 17
    %v459 = vld [vmem:[%s458] ss:$2 sm:$0xff]
    %v460 = vpack.c.bf16 %v459, %v457
    %s461 = scalar_lea.vmem %s3, 64
    %v462 = vld [vmem:[%s461] sm:$0xf]
    %v463 = vld [vmem:[%s461 + $0x4] sm:$0xf]
    %v464 = vld [vmem:[%s461 + $0x8] sm:$0xf]
    %v465 = vld [vmem:[%s461 + $0xc] sm:$0xf]
    %v466 = vld [vmem:[%s461 + $0x10] sm:$0xf]
    %v467 = vld [vmem:[%s461 + $0x14] sm:$0xf]
    %v468 = vld [vmem:[%s461 + $0x18] sm:$0xf]
    %v469 = vld [vmem:[%s461 + $0x1c] sm:$0xf]
    %v470 = vld [vmem:[%s461 + $0x20] sm:$0xf]
    %v471 = vld [vmem:[%s461 + $0x24] sm:$0xf]
    %v472 = vld [vmem:[%s461 + $0x28] sm:$0xf]
    %v473 = vld [vmem:[%s461 + $0x2c] sm:$0xf]
    %v474 = vld [vmem:[%s461 + $0x30] sm:$0xf]
    %v475 = vld [vmem:[%s461 + $0x34] sm:$0xf]
    %v476 = vld [vmem:[%s461 + $0x38] sm:$0xf]
    %v477 = vld [vmem:[%s461 + $0x3c] sm:$0xf]
    %v494 = vunpack.c.l.b16 %v462
    %v495 = vunpack.c.l.b16 %v463
    %v496 = vunpack.c.l.b16 %v464
    %v497 = vunpack.c.l.b16 %v465
    %v498 = vunpack.c.l.b16 %v466
    %v499 = vunpack.c.l.b16 %v467
    %v500 = vunpack.c.l.b16 %v468
    %v501 = vunpack.c.l.b16 %v469
    %v502 = vunpack.c.l.b16 %v470
    %v503 = vunpack.c.l.b16 %v471
    %v504 = vunpack.c.l.b16 %v472
    %v505 = vunpack.c.l.b16 %v473
    %v506 = vunpack.c.l.b16 %v474
    %v507 = vunpack.c.l.b16 %v475
    %v508 = vunpack.c.l.b16 %v476
    %v509 = vunpack.c.l.b16 %v477
    %v510 = vpack.c.b16 %v495, %v494
    %v511 = vpack.c.b16 %v497, %v496
    %v512 = vpack.c.b16 %v499, %v498
    %v513 = vpack.c.b16 %v501, %v500
    %v514 = vpack.c.b16 %v503, %v502
    %v515 = vpack.c.b16 %v505, %v504
    %v516 = vpack.c.b16 %v507, %v506
    %v517 = vpack.c.b16 %v509, %v508
    %526 = vmatprep.subr.bf16.mxu0 0
    %527 = vmatpush1.bf16.msra.mxu0 %v510
    %528 = vmatprep.subr.bf16.mxu0 0
    %529 = vmatpush1.bf16.msra.mxu0 %v511
    %530 = vmatprep.subr.bf16.mxu0 0
    %531 = vmatpush1.bf16.msra.mxu0 %v512
    %532 = vmatprep.subr.bf16.mxu0 0
    %533 = vmatpush1.bf16.msra.mxu0 %v513
    %534 = vmatprep.subr.bf16.mxu0 0
    %535 = vmatpush1.bf16.msra.mxu0 %v514
    %536 = vmatprep.subr.bf16.mxu0 0
    %537 = vmatpush1.bf16.msra.mxu0 %v515
    %538 = vmatprep.subr.bf16.mxu0 0
    %539 = vmatpush1.bf16.msra.mxu0 %v516
    %540 = vmatprep.subr.bf16.mxu0 0
    %541 = vmatpush1.bf16.msra.mxu0 %v517
    %542 = vmatprep.subr.bf16.mxu0 0
    %543 = vmatpush1.bf16.msra.mxu0 0
    %544 = vmatprep.subr.bf16.mxu0 0
    %545 = vmatpush1.bf16.msra.mxu0 0
    %546 = vmatprep.subr.bf16.mxu0 0
    %547 = vmatpush1.bf16.msra.mxu0 0
    %548 = vmatprep.subr.bf16.mxu0 0
    %549 = vmatpush1.bf16.msra.mxu0 0
    %550 = vmatprep.subr.bf16.mxu0 0
    %551 = vmatpush1.bf16.msra.mxu0 0
    %552 = vmatprep.subr.bf16.mxu0 0
    %553 = vmatpush1.bf16.msra.mxu0 0
    %554 = vmatprep.subr.bf16.mxu0 0
    %555 = vmatpush1.bf16.msra.mxu0 0
    %556 = vmatprep.subr.bf16.mxu0 0
    %557 = vmatpush1.bf16.msra.mxu0 0
    %558 = vmatprep.mubr.bf16.mxu0 0
    %559 = vmatmul.mubr.bf16.gmra.mrb[0].mxu0 %v460
    %v560 = vpop.f32.mrb[0].mxu0
    %v561 = vadd.f32 0.0, %v560
    %v562 = vpop.f32.mrb[0].mxu0
    %v563 = vpop.f32.mrb[0].mxu0
    %v564 = vadd.f32 0.0, %v563
    %v565 = vpop.f32.mrb[0].mxu0
    %566 = vdwg.mxu0
    %v583 = vunpack.c.l.b16 %v440
    %v584 = vunpack.c.l.b16 %v441
    %v585 = vunpack.c.l.b16 %v442
    %v586 = vunpack.c.l.b16 %v443
    %v587 = vunpack.c.l.b16 %v444
    %v588 = vunpack.c.l.b16 %v445
    %v589 = vunpack.c.l.b16 %v446
    %v590 = vunpack.c.l.b16 %v447
    %v591 = vunpack.c.l.b16 %v448
    %v592 = vunpack.c.l.b16 %v449
    %v593 = vunpack.c.l.b16 %v450
    %v594 = vunpack.c.l.b16 %v451
    %v595 = vunpack.c.l.b16 %v452
    %v596 = vunpack.c.l.b16 %v453
    %v597 = vunpack.c.l.b16 %v454
    %v598 = vunpack.c.l.b16 %v455
    %v599 = vpack.c.b16 %v584, %v583
    %v600 = vpack.c.b16 %v586, %v585
    %v601 = vpack.c.b16 %v588, %v587
    %v602 = vpack.c.b16 %v590, %v589
    %v603 = vpack.c.b16 %v592, %v591
    %v604 = vpack.c.b16 %v594, %v593
    %v605 = vpack.c.b16 %v596, %v595
    %v606 = vpack.c.b16 %v598, %v597
    %615 = vmatprep.subr.bf16.mxu0 0
    %616 = vmatpush1.bf16.msra.mxu0 %v599
    %617 = vmatprep.subr.bf16.mxu0 0
    %618 = vmatpush1.bf16.msra.mxu0 %v600
    %619 = vmatprep.subr.bf16.mxu0 0
    %620 = vmatpush1.bf16.msra.mxu0 %v601
    %621 = vmatprep.subr.bf16.mxu0 0
    %622 = vmatpush1.bf16.msra.mxu0 %v602
    %623 = vmatprep.subr.bf16.mxu0 0
    %624 = vmatpush1.bf16.msra.mxu0 %v603
    %625 = vmatprep.subr.bf16.mxu0 0
    %626 = vmatpush1.bf16.msra.mxu0 %v604
    %627 = vmatprep.subr.bf16.mxu0 0
    %628 = vmatpush1.bf16.msra.mxu0 %v605
    %629 = vmatprep.subr.bf16.mxu0 0
    %630 = vmatpush1.bf16.msra.mxu0 %v606
    %631 = vmatprep.subr.bf16.mxu0 0
    %632 = vmatpush1.bf16.msra.mxu0 0
    %633 = vmatprep.subr.bf16.mxu0 0
    %634 = vmatpush1.bf16.msra.mxu0 0
    %635 = vmatprep.subr.bf16.mxu0 0
    %636 = vmatpush1.bf16.msra.mxu0 0
    %637 = vmatprep.subr.bf16.mxu0 0
    %638 = vmatpush1.bf16.msra.mxu0 0
    %639 = vmatprep.subr.bf16.mxu0 0
    %640 = vmatpush1.bf16.msra.mxu0 0
    %641 = vmatprep.subr.bf16.mxu0 0
    %642 = vmatpush1.bf16.msra.mxu0 0
    %643 = vmatprep.subr.bf16.mxu0 0
    %644 = vmatpush1.bf16.msra.mxu0 0
    %645 = vmatprep.subr.bf16.mxu0 0
    %646 = vmatpush1.bf16.msra.mxu0 0
    %647 = vmatprep.mubr.bf16.mxu0 0
    %648 = vmatmul.mubr.bf16.gmra.mrb[0].mxu0 %v439
    %v649 = vpop.f32.mrb[0].mxu0
    %v650 = vadd.f32 %v561, %v649
    %v651 = vpop.f32.mrb[0].mxu0
    %v652 = vpop.f32.mrb[0].mxu0
    %v653 = vadd.f32 %v564, %v652
    %v654 = vpop.f32.mrb[0].mxu0
    %655 = vdwg.mxu0
    %s656 = scalar_lea.vmem [#allocation2], 2
    %v657 = vld [vmem:[%s656] ss:$2 sm:$0xff]
    %s658 = scalar_lea.vmem [#allocation2], 18
    %v659 = vld [vmem:[%s658] ss:$2 sm:$0xff]
    %v660 = vpack.c.bf16 %v659, %v657
    %s661 = scalar_lea.vmem %s3, 128
    %v662 = vld [vmem:[%s661] sm:$0xf]
    %v663 = vld [vmem:[%s661 + $0x4] sm:$0xf]
    %v664 = vld [vmem:[%s661 + $0x8] sm:$0xf]
    %v665 = vld [vmem:[%s661 + $0xc] sm:$0xf]
    %v666 = vld [vmem:[%s661 + $0x10] sm:$0xf]
    %v667 = vld [vmem:[%s661 + $0x14] sm:$0xf]
    %v668 = vld [vmem:[%s661 + $0x18] sm:$0xf]
    %v669 = vld [vmem:[%s661 + $0x1c] sm:$0xf]
    %v670 = vld [vmem:[%s661 + $0x20] sm:$0xf]
    %v671 = vld [vmem:[%s661 + $0x24] sm:$0xf]
    %v672 = vld [vmem:[%s661 + $0x28] sm:$0xf]
    %v673 = vld [vmem:[%s661 + $0x2c] sm:$0xf]
    %v674 = vld [vmem:[%s661 + $0x30] sm:$0xf]
    %v675 = vld [vmem:[%s661 + $0x34] sm:$0xf]
    %v676 = vld [vmem:[%s661 + $0x38] sm:$0xf]
    %v677 = vld [vmem:[%s661 + $0x3c] sm:$0xf]
    %v694 = vunpack.c.l.b16 %v662
    %v695 = vunpack.c.l.b16 %v663
    %v696 = vunpack.c.l.b16 %v664
    %v697 = vunpack.c.l.b16 %v665
    %v698 = vunpack.c.l.b16 %v666
    %v699 = vunpack.c.l.b16 %v667
    %v700 = vunpack.c.l.b16 %v668
    %v701 = vunpack.c.l.b16 %v669
    %v702 = vunpack.c.l.b16 %v670
    %v703 = vunpack.c.l.b16 %v671
    %v704 = vunpack.c.l.b16 %v672
    %v705 = vunpack.c.l.b16 %v673
    %v706 = vunpack.c.l.b16 %v674
    %v707 = vunpack.c.l.b16 %v675
    %v708 = vunpack.c.l.b16 %v676
    %v709 = vunpack.c.l.b16 %v677
    %v710 = vpack.c.b16 %v695, %v694
    %v711 = vpack.c.b16 %v697, %v696
    %v712 = vpack.c.b16 %v699, %v698
    %v713 = vpack.c.b16 %v701, %v700
    %v714 = vpack.c.b16 %v703, %v702
    %v715 = vpack.c.b16 %v705, %v704
    %v716 = vpack.c.b16 %v707, %v706
    %v717 = vpack.c.b16 %v709, %v708
    %726 = vmatprep.subr.bf16.mxu0 0
    %727 = vmatpush1.bf16.msra.mxu0 %v710
    %728 = vmatprep.subr.bf16.mxu0 0
    %729 = vmatpush1.bf16.msra.mxu0 %v711
    %730 = vmatprep.subr.bf16.mxu0 0
    %731 = vmatpush1.bf16.msra.mxu0 %v712
    %732 = vmatprep.subr.bf16.mxu0 0
    %733 = vmatpush1.bf16.msra.mxu0 %v713
    %734 = vmatprep.subr.bf16.mxu0 0
    %735 = vmatpush1.bf16.msra.mxu0 %v714
    %736 = vmatprep.subr.bf16.mxu0 0
    %737 = vmatpush1.bf16.msra.mxu0 %v715
    %738 = vmatprep.subr.bf16.mxu0 0
    %739 = vmatpush1.bf16.msra.mxu0 %v716
    %740 = vmatprep.subr.bf16.mxu0 0
    %741 = vmatpush1.bf16.msra.mxu0 %v717
    %742 = vmatprep.subr.bf16.mxu0 0
    %743 = vmatpush1.bf16.msra.mxu0 0
    %744 = vmatprep.subr.bf16.mxu0 0
    %745 = vmatpush1.bf16.msra.mxu0 0
    %746 = vmatprep.subr.bf16.mxu0 0
    %747 = vmatpush1.bf16.msra.mxu0 0
    %748 = vmatprep.subr.bf16.mxu0 0
    %749 = vmatpush1.bf16.msra.mxu0 0
    %750 = vmatprep.subr.bf16.mxu0 0
    %751 = vmatpush1.bf16.msra.mxu0 0
    %752 = vmatprep.subr.bf16.mxu0 0
    %753 = vmatpush1.bf16.msra.mxu0 0
    %754 = vmatprep.subr.bf16.mxu0 0
    %755 = vmatpush1.bf16.msra.mxu0 0
    %756 = vmatprep.subr.bf16.mxu0 0
    %757 = vmatpush1.bf16.msra.mxu0 0
    %758 = vmatprep.mubr.bf16.mxu0 0
    %759 = vmatmul.mubr.bf16.gmra.mrb[0].mxu0 %v660
    %v760 = vpop.f32.mrb[0].mxu0
    %v761 = vadd.f32 0.0, %v760
    %v762 = vpop.f32.mrb[0].mxu0
    %v763 = vpop.f32.mrb[0].mxu0
    %v764 = vadd.f32 0.0, %v763
    %v765 = vpop.f32.mrb[0].mxu0
    %766 = vdwg.mxu0
    %v767 = vadd.f32 %v650, %v761
    %v768 = vadd.f32 %v653, %v764
    %v769 = vld [vmem:[%s4] sm:$0x1]
    %v771 = vlaneseq
    %v772 = vshrl.u32 %v771, 7
    %v773 = vsub.s32 0, %v772
    %v774 = vrot.slane %v769, %v773
    %v776 = vadd.f32 %v767, %v774
    %v777 = vadd.f32 %v768, %v774
    %v778 = vmax.f32 %v776, 0.0
    %v779 = vmax.f32 %v777, 0.0
    %780 = vst [vmem:[#allocation3] sm:$0xff] %v778
    %781 = vst [vmem:[#allocation3 + $0x8] sm:$0xff] %v779
    %v782 = vld [vmem:[#allocation3] ss:$2 sm:$0xff]
    %v783 = vpack.c.bf16 %v782, %v782
    %v784 = vld [vmem:[%s5] sm:$0xf]
    %v785 = vld [vmem:[%s5 + $0x4] sm:$0xf]
    %v786 = vld [vmem:[%s5 + $0x8] sm:$0xf]
    %v787 = vld [vmem:[%s5 + $0xc] sm:$0xf]
    %v788 = vld [vmem:[%s5 + $0x10] sm:$0xf]
    %v789 = vld [vmem:[%s5 + $0x14] sm:$0xf]
    %v790 = vld [vmem:[%s5 + $0x18] sm:$0xf]
    %v791 = vld [vmem:[%s5 + $0x1c] sm:$0xf]
    %v792 = vld [vmem:[%s5 + $0x20] sm:$0xf]
    %v793 = vld [vmem:[%s5 + $0x24] sm:$0xf]
    %v794 = vld [vmem:[%s5 + $0x28] sm:$0xf]
    %v795 = vld [vmem:[%s5 + $0x2c] sm:$0xf]
    %v796 = vld [vmem:[%s5 + $0x30] sm:$0xf]
    %v797 = vld [vmem:[%s5 + $0x34] sm:$0xf]
    %v798 = vld [vmem:[%s5 + $0x38] sm:$0xf]
    %v799 = vld [vmem:[%s5 + $0x3c] sm:$0xf]
    %s800 = scalar_lea.vmem [#allocation3], 1
    %v801 = vld [vmem:[%s800] ss:$2 sm:$0xff]
    %v802 = vpack.c.bf16 %v801, %v801
    %s803 = scalar_lea.vmem %s5, 64
    %v804 = vld [vmem:[%s803] sm:$0xf]
    %v805 = vld [vmem:[%s803 + $0x4] sm:$0xf]
    %v806 = vld [vmem:[%s803 + $0x8] sm:$0xf]
    %v807 = vld [vmem:[%s803 + $0xc] sm:$0xf]
    %v808 = vld [vmem:[%s803 + $0x10] sm:$0xf]
    %v809 = vld [vmem:[%s803 + $0x14] sm:$0xf]
    %v810 = vld [vmem:[%s803 + $0x18] sm:$0xf]
    %v811 = vld [vmem:[%s803 + $0x1c] sm:$0xf]
    %v812 = vld [vmem:[%s803 + $0x20] sm:$0xf]
    %v813 = vld [vmem:[%s803 + $0x24] sm:$0xf]
    %v814 = vld [vmem:[%s803 + $0x28] sm:$0xf]
    %v815 = vld [vmem:[%s803 + $0x2c] sm:$0xf]
    %v816 = vld [vmem:[%s803 + $0x30] sm:$0xf]
    %v817 = vld [vmem:[%s803 + $0x34] sm:$0xf]
    %v818 = vld [vmem:[%s803 + $0x38] sm:$0xf]
    %v819 = vld [vmem:[%s803 + $0x3c] sm:$0xf]
    %v836 = vunpack.c.l.b16 %v804
    %v837 = vunpack.c.l.b16 %v805
    %v838 = vunpack.c.l.b16 %v806
    %v839 = vunpack.c.l.b16 %v807
    %v840 = vunpack.c.l.b16 %v808
    %v841 = vunpack.c.l.b16 %v809
    %v842 = vunpack.c.l.b16 %v810
    %v843 = vunpack.c.l.b16 %v811
    %v844 = vunpack.c.l.b16 %v812
    %v845 = vunpack.c.l.b16 %v813
    %v846 = vunpack.c.l.b16 %v814
    %v847 = vunpack.c.l.b16 %v815
    %v848 = vunpack.c.l.b16 %v816
    %v849 = vunpack.c.l.b16 %v817
    %v850 = vunpack.c.l.b16 %v818
    %v851 = vunpack.c.l.b16 %v819
    %v852 = vpack.c.b16 %v837, %v836
    %v853 = vpack.c.b16 %v839, %v838
    %v854 = vpack.c.b16 %v841, %v840
    %v855 = vpack.c.b16 %v843, %v842
    %v856 = vpack.c.b16 %v845, %v844
    %v857 = vpack.c.b16 %v847, %v846
    %v858 = vpack.c.b16 %v849, %v848
    %v859 = vpack.c.b16 %v851, %v850
    %868 = vmatprep.subr.bf16.mxu0 0
    %869 = vmatpush1.bf16.msra.mxu0 %v852
    %870 = vmatprep.subr.bf16.mxu0 0
    %871 = vmatpush1.bf16.msra.mxu0 %v853
    %872 = vmatprep.subr.bf16.mxu0 0
    %873 = vmatpush1.bf16.msra.mxu0 %v854
    %874 = vmatprep.subr.bf16.mxu0 0
    %875 = vmatpush1.bf16.msra.mxu0 %v855
    %876 = vmatprep.subr.bf16.mxu0 0
    %877 = vmatpush1.bf16.msra.mxu0 %v856
    %878 = vmatprep.subr.bf16.mxu0 0
    %879 = vmatpush1.bf16.msra.mxu0 %v857
    %880 = vmatprep.subr.bf16.mxu0 0
    %881 = vmatpush1.bf16.msra.mxu0 %v858
    %882 = vmatprep.subr.bf16.mxu0 0
    %883 = vmatpush1.bf16.msra.mxu0 %v859
    %884 = vmatprep.subr.bf16.mxu0 0
    %885 = vmatpush1.bf16.msra.mxu0 0
    %886 = vmatprep.subr.bf16.mxu0 0
    %887 = vmatpush1.bf16.msra.mxu0 0
    %888 = vmatprep.subr.bf16.mxu0 0
    %889 = vmatpush1.bf16.msra.mxu0 0
    %890 = vmatprep.subr.bf16.mxu0 0
    %891 = vmatpush1.bf16.msra.mxu0 0
    %892 = vmatprep.subr.bf16.mxu0 0
    %893 = vmatpush1.bf16.msra.mxu0 0
    %894 = vmatprep.subr.bf16.mxu0 0
    %895 = vmatpush1.bf16.msra.mxu0 0
    %896 = vmatprep.subr.bf16.mxu0 0
    %897 = vmatpush1.bf16.msra.mxu0 0
    %898 = vmatprep.subr.bf16.mxu0 0
    %899 = vmatpush1.bf16.msra.mxu0 0
    %900 = vmatprep.mubr.bf16.mxu0 0
    %901 = vmatmul.mubr.bf16.gmra.mrb[0].mxu0 %v802
    %v902 = vpop.f32.mrb[0].mxu0
    %v903 = vadd.f32 0.0, %v902
    %v904 = vpop.f32.mrb[0].mxu0
    %v905 = vpop.f32.mrb[0].mxu0
    %v906 = vpop.f32.mrb[0].mxu0
    %907 = vdwg.mxu0
    %v924 = vunpack.c.l.b16 %v784
    %v925 = vunpack.c.l.b16 %v785
    %v926 = vunpack.c.l.b16 %v786
    %v927 = vunpack.c.l.b16 %v787
    %v928 = vunpack.c.l.b16 %v788
    %v929 = vunpack.c.l.b16 %v789
    %v930 = vunpack.c.l.b16 %v790
    %v931 = vunpack.c.l.b16 %v791
    %v932 = vunpack.c.l.b16 %v792
    %v933 = vunpack.c.l.b16 %v793
    %v934 = vunpack.c.l.b16 %v794
    %v935 = vunpack.c.l.b16 %v795
    %v936 = vunpack.c.l.b16 %v796
    %v937 = vunpack.c.l.b16 %v797
    %v938 = vunpack.c.l.b16 %v798
    %v939 = vunpack.c.l.b16 %v799
    %v940 = vpack.c.b16 %v925, %v924
    %v941 = vpack.c.b16 %v927, %v926
    %v942 = vpack.c.b16 %v929, %v928
    %v943 = vpack.c.b16 %v931, %v930
    %v944 = vpack.c.b16 %v933, %v932
    %v945 = vpack.c.b16 %v935, %v934
    %v946 = vpack.c.b16 %v937, %v936
    %v947 = vpack.c.b16 %v939, %v938
    %956 = vmatprep.subr.bf16.mxu0 0
    %957 = vmatpush1.bf16.msra.mxu0 %v940
    %958 = vmatprep.subr.bf16.mxu0 0
    %959 = vmatpush1.bf16.msra.mxu0 %v941
    %960 = vmatprep.subr.bf16.mxu0 0
    %961 = vmatpush1.bf16.msra.mxu0 %v942
    %962 = vmatprep.subr.bf16.mxu0 0
    %963 = vmatpush1.bf16.msra.mxu0 %v943
    %964 = vmatprep.subr.bf16.mxu0 0
    %965 = vmatpush1.bf16.msra.mxu0 %v944
    %966 = vmatprep.subr.bf16.mxu0 0
    %967 = vmatpush1.bf16.msra.mxu0 %v945
    %968 = vmatprep.subr.bf16.mxu0 0
    %969 = vmatpush1.bf16.msra.mxu0 %v946
    %970 = vmatprep.subr.bf16.mxu0 0
    %971 = vmatpush1.bf16.msra.mxu0 %v947
    %972 = vmatprep.subr.bf16.mxu0 0
    %973 = vmatpush1.bf16.msra.mxu0 0
    %974 = vmatprep.subr.bf16.mxu0 0
    %975 = vmatpush1.bf16.msra.mxu0 0
    %976 = vmatprep.subr.bf16.mxu0 0
    %977 = vmatpush1.bf16.msra.mxu0 0
    %978 = vmatprep.subr.bf16.mxu0 0
    %979 = vmatpush1.bf16.msra.mxu0 0
    %980 = vmatprep.subr.bf16.mxu0 0
    %981 = vmatpush1.bf16.msra.mxu0 0
    %982 = vmatprep.subr.bf16.mxu0 0
    %983 = vmatpush1.bf16.msra.mxu0 0
    %984 = vmatprep.subr.bf16.mxu0 0
    %985 = vmatpush1.bf16.msra.mxu0 0
    %986 = vmatprep.subr.bf16.mxu0 0
    %987 = vmatpush1.bf16.msra.mxu0 0
    %988 = vmatprep.mubr.bf16.mxu0 0
    %989 = vmatmul.mubr.bf16.gmra.mrb[0].mxu0 %v783
    %v990 = vpop.f32.mrb[0].mxu0
    %v991 = vadd.f32 %v903, %v990
    %v992 = vpop.f32.mrb[0].mxu0
    %v993 = vpop.f32.mrb[0].mxu0
    %v994 = vpop.f32.mrb[0].mxu0
    %995 = vdwg.mxu0
    %s996 = scalar_lea.vmem [#allocation3], 2
    %v997 = vld [vmem:[%s996] ss:$2 sm:$0xff]
    %v998 = vpack.c.bf16 %v997, %v997
    %s999 = scalar_lea.vmem %s5, 128
    %v1000 = vld [vmem:[%s999] sm:$0xf]
    %v1001 = vld [vmem:[%s999 + $0x4] sm:$0xf]
    %v1002 = vld [vmem:[%s999 + $0x8] sm:$0xf]
    %v1003 = vld [vmem:[%s999 + $0xc] sm:$0xf]
    %v1004 = vld [vmem:[%s999 + $0x10] sm:$0xf]
    %v1005 = vld [vmem:[%s999 + $0x14] sm:$0xf]
    %v1006 = vld [vmem:[%s999 + $0x18] sm:$0xf]
    %v1007 = vld [vmem:[%s999 + $0x1c] sm:$0xf]
    %v1008 = vld [vmem:[%s999 + $0x20] sm:$0xf]
    %v1009 = vld [vmem:[%s999 + $0x24] sm:$0xf]
    %v1010 = vld [vmem:[%s999 + $0x28] sm:$0xf]
    %v1011 = vld [vmem:[%s999 + $0x2c] sm:$0xf]
    %v1012 = vld [vmem:[%s999 + $0x30] sm:$0xf]
    %v1013 = vld [vmem:[%s999 + $0x34] sm:$0xf]
    %v1014 = vld [vmem:[%s999 + $0x38] sm:$0xf]
    %v1015 = vld [vmem:[%s999 + $0x3c] sm:$0xf]
    %v1032 = vunpack.c.l.b16 %v1000
    %v1033 = vunpack.c.l.b16 %v1001
    %v1034 = vunpack.c.l.b16 %v1002
    %v1035 = vunpack.c.l.b16 %v1003
    %v1036 = vunpack.c.l.b16 %v1004
    %v1037 = vunpack.c.l.b16 %v1005
    %v1038 = vunpack.c.l.b16 %v1006
    %v1039 = vunpack.c.l.b16 %v1007
    %v1040 = vunpack.c.l.b16 %v1008
    %v1041 = vunpack.c.l.b16 %v1009
    %v1042 = vunpack.c.l.b16 %v1010
    %v1043 = vunpack.c.l.b16 %v1011
    %v1044 = vunpack.c.l.b16 %v1012
    %v1045 = vunpack.c.l.b16 %v1013
    %v1046 = vunpack.c.l.b16 %v1014
    %v1047 = vunpack.c.l.b16 %v1015
    %v1048 = vpack.c.b16 %v1033, %v1032
    %v1049 = vpack.c.b16 %v1035, %v1034
    %v1050 = vpack.c.b16 %v1037, %v1036
    %v1051 = vpack.c.b16 %v1039, %v1038
    %v1052 = vpack.c.b16 %v1041, %v1040
    %v1053 = vpack.c.b16 %v1043, %v1042
    %v1054 = vpack.c.b16 %v1045, %v1044
    %v1055 = vpack.c.b16 %v1047, %v1046
    %1064 = vmatprep.subr.bf16.mxu0 0
    %1065 = vmatpush1.bf16.msra.mxu0 %v1048
    %1066 = vmatprep.subr.bf16.mxu0 0
    %1067 = vmatpush1.bf16.msra.mxu0 %v1049
    %1068 = vmatprep.subr.bf16.mxu0 0
    %1069 = vmatpush1.bf16.msra.mxu0 %v1050
    %1070 = vmatprep.subr.bf16.mxu0 0
    %1071 = vmatpush1.bf16.msra.mxu0 %v1051
    %1072 = vmatprep.subr.bf16.mxu0 0
    %1073 = vmatpush1.bf16.msra.mxu0 %v1052
    %1074 = vmatprep.subr.bf16.mxu0 0
    %1075 = vmatpush1.bf16.msra.mxu0 %v1053
    %1076 = vmatprep.subr.bf16.mxu0 0
    %1077 = vmatpush1.bf16.msra.mxu0 %v1054
    %1078 = vmatprep.subr.bf16.mxu0 0
    %1079 = vmatpush1.bf16.msra.mxu0 %v1055
    %1080 = vmatprep.subr.bf16.mxu0 0
    %1081 = vmatpush1.bf16.msra.mxu0 0
    %1082 = vmatprep.subr.bf16.mxu0 0
    %1083 = vmatpush1.bf16.msra.mxu0 0
    %1084 = vmatprep.subr.bf16.mxu0 0
    %1085 = vmatpush1.bf16.msra.mxu0 0
    %1086 = vmatprep.subr.bf16.mxu0 0
    %1087 = vmatpush1.bf16.msra.mxu0 0
    %1088 = vmatprep.subr.bf16.mxu0 0
    %1089 = vmatpush1.bf16.msra.mxu0 0
    %1090 = vmatprep.subr.bf16.mxu0 0
    %1091 = vmatpush1.bf16.msra.mxu0 0
    %1092 = vmatprep.subr.bf16.mxu0 0
    %1093 = vmatpush1.bf16.msra.mxu0 0
    %1094 = vmatprep.subr.bf16.mxu0 0
    %1095 = vmatpush1.bf16.msra.mxu0 0
    %1096 = vmatprep.mubr.bf16.mxu0 0
    %1097 = vmatmul.mubr.bf16.gmra.mrb[0].mxu0 %v998
    %v1098 = vpop.f32.mrb[0].mxu0
    %v1099 = vadd.f32 0.0, %v1098
    %v1100 = vpop.f32.mrb[0].mxu0
    %v1101 = vpop.f32.mrb[0].mxu0
    %v1102 = vpop.f32.mrb[0].mxu0
    %1103 = vdwg.mxu0
    %v1104 = vadd.f32 %v991, %v1099
    %v1105 = vld [vmem:[%s6] sm:$0x1]
    %v1107 = vlaneseq
    %v1108 = vshrl.u32 %v1107, 7
    %v1109 = vsub.s32 0, %v1108
    %v1110 = vrot.slane %v1105, %v1109
    %v1112 = vadd.f32 %v1104, %v1110
    %v1113 = vmax.f32 %v1112, 0.0
    %1114 = vst [vmem:[#allocation4] sm:$0xff] %v1113
    %v1115 = vld [vmem:[#allocation4] ss:$2 sm:$0xf]
    %v1116 = vpack.c.bf16 %v1115, %v1115
    %v1117 = vld [vmem:[%s7] sm:$0xf]
    %v1118 = vld [vmem:[%s7 + $0x4] sm:$0xf]
    %v1119 = vld [vmem:[%s7 + $0x8] sm:$0xf]
    %v1120 = vld [vmem:[%s7 + $0xc] sm:$0xf]
    %v1121 = vld [vmem:[%s7 + $0x10] sm:$0xf]
    %v1122 = vld [vmem:[%s7 + $0x14] sm:$0xf]
    %v1123 = vld [vmem:[%s7 + $0x18] sm:$0xf]
    %v1124 = vld [vmem:[%s7 + $0x1c] sm:$0xf]
    %v1125 = vld [vmem:[%s7 + $0x20] sm:$0xf]
    %v1126 = vld [vmem:[%s7 + $0x24] sm:$0xf]
    %v1127 = vld [vmem:[%s7 + $0x28] sm:$0xf]
    %v1128 = vld [vmem:[%s7 + $0x2c] sm:$0xf]
    %v1129 = vld [vmem:[%s7 + $0x30] sm:$0xf]
    %v1130 = vld [vmem:[%s7 + $0x34] sm:$0xf]
    %v1131 = vld [vmem:[%s7 + $0x38] sm:$0xf]
    %v1132 = vld [vmem:[%s7 + $0x3c] sm:$0xf]
    %s1133 = scalar_lea.vmem [#allocation4], 1
    %v1134 = vld [vmem:[%s1133] ss:$2 sm:$0xf]
    %v1135 = vpack.c.bf16 %v1134, %v1134
    %s1136 = scalar_lea.vmem %s7, 64
    %v1137 = vld [vmem:[%s1136] sm:$0xf]
    %v1138 = vld [vmem:[%s1136 + $0x4] sm:$0xf]
    %v1139 = vld [vmem:[%s1136 + $0x8] sm:$0xf]
    %v1140 = vld [vmem:[%s1136 + $0xc] sm:$0xf]
    %v1141 = vld [vmem:[%s1136 + $0x10] sm:$0xf]
    %v1142 = vld [vmem:[%s1136 + $0x14] sm:$0xf]
    %v1143 = vld [vmem:[%s1136 + $0x18] sm:$0xf]
    %v1144 = vld [vmem:[%s1136 + $0x1c] sm:$0xf]
    %v1145 = vld [vmem:[%s1136 + $0x20] sm:$0xf]
    %v1146 = vld [vmem:[%s1136 + $0x24] sm:$0xf]
    %v1147 = vld [vmem:[%s1136 + $0x28] sm:$0xf]
    %v1148 = vld [vmem:[%s1136 + $0x2c] sm:$0xf]
    %v1149 = vld [vmem:[%s1136 + $0x30] sm:$0xf]
    %v1150 = vld [vmem:[%s1136 + $0x34] sm:$0xf]
    %v1151 = vld [vmem:[%s1136 + $0x38] sm:$0xf]
    %v1152 = vld [vmem:[%s1136 + $0x3c] sm:$0xf]
    %v1169 = vunpack.c.l.b16 %v1137
    %v1170 = vunpack.c.l.b16 %v1138
    %v1171 = vunpack.c.l.b16 %v1139
    %v1172 = vunpack.c.l.b16 %v1140
    %v1173 = vunpack.c.l.b16 %v1141
    %v1174 = vunpack.c.l.b16 %v1142
    %v1175 = vunpack.c.l.b16 %v1143
    %v1176 = vunpack.c.l.b16 %v1144
    %v1177 = vunpack.c.l.b16 %v1145
    %v1178 = vunpack.c.l.b16 %v1146
    %v1179 = vunpack.c.l.b16 %v1147
    %v1180 = vunpack.c.l.b16 %v1148
    %v1181 = vunpack.c.l.b16 %v1149
    %v1182 = vunpack.c.l.b16 %v1150
    %v1183 = vunpack.c.l.b16 %v1151
    %v1184 = vunpack.c.l.b16 %v1152
    %v1185 = vpack.c.b16 %v1170, %v1169
    %v1186 = vpack.c.b16 %v1172, %v1171
    %v1187 = vpack.c.b16 %v1174, %v1173
    %v1188 = vpack.c.b16 %v1176, %v1175
    %v1189 = vpack.c.b16 %v1178, %v1177
    %v1190 = vpack.c.b16 %v1180, %v1179
    %v1191 = vpack.c.b16 %v1182, %v1181
    %v1192 = vpack.c.b16 %v1184, %v1183
    %1201 = vmatprep.subr.bf16.mxu0 0
    %1202 = vmatpush1.bf16.msra.mxu0 %v1185
    %1203 = vmatprep.subr.bf16.mxu0 0
    %1204 = vmatpush1.bf16.msra.mxu0 %v1186
    %1205 = vmatprep.subr.bf16.mxu0 0
    %1206 = vmatpush1.bf16.msra.mxu0 %v1187
    %1207 = vmatprep.subr.bf16.mxu0 0
    %1208 = vmatpush1.bf16.msra.mxu0 %v1188
    %1209 = vmatprep.subr.bf16.mxu0 0
    %1210 = vmatpush1.bf16.msra.mxu0 %v1189
    %1211 = vmatprep.subr.bf16.mxu0 0
    %1212 = vmatpush1.bf16.msra.mxu0 %v1190
    %1213 = vmatprep.subr.bf16.mxu0 0
    %1214 = vmatpush1.bf16.msra.mxu0 %v1191
    %1215 = vmatprep.subr.bf16.mxu0 0
    %1216 = vmatpush1.bf16.msra.mxu0 %v1192
    %1217 = vmatprep.subr.bf16.mxu0 0
    %1218 = vmatpush1.bf16.msra.mxu0 0
    %1219 = vmatprep.subr.bf16.mxu0 0
    %1220 = vmatpush1.bf16.msra.mxu0 0
    %1221 = vmatprep.subr.bf16.mxu0 0
    %1222 = vmatpush1.bf16.msra.mxu0 0
    %1223 = vmatprep.subr.bf16.mxu0 0
    %1224 = vmatpush1.bf16.msra.mxu0 0
    %1225 = vmatprep.subr.bf16.mxu0 0
    %1226 = vmatpush1.bf16.msra.mxu0 0
    %1227 = vmatprep.subr.bf16.mxu0 0
    %1228 = vmatpush1.bf16.msra.mxu0 0
    %1229 = vmatprep.subr.bf16.mxu0 0
    %1230 = vmatpush1.bf16.msra.mxu0 0
    %1231 = vmatprep.subr.bf16.mxu0 0
    %1232 = vmatpush1.bf16.msra.mxu0 0
    %1233 = vmatprep.mubr.bf16.mxu0 0
    %1234 = vmatmul.mubr.bf16.gmra.mrb[0].mxu0 %v1135
    %v1235 = vpop.f32.mrb[0].mxu0
    %v1236 = vadd.f32 0.0, %v1235
    %v1237 = vpop.f32.mrb[0].mxu0
    %v1238 = vpop.f32.mrb[0].mxu0
    %v1239 = vpop.f32.mrb[0].mxu0
    %1240 = vdwg.mxu0
    %v1257 = vunpack.c.l.b16 %v1117
    %v1258 = vunpack.c.l.b16 %v1118
    %v1259 = vunpack.c.l.b16 %v1119
    %v1260 = vunpack.c.l.b16 %v1120
    %v1261 = vunpack.c.l.b16 %v1121
    %v1262 = vunpack.c.l.b16 %v1122
    %v1263 = vunpack.c.l.b16 %v1123
    %v1264 = vunpack.c.l.b16 %v1124
    %v1265 = vunpack.c.l.b16 %v1125
    %v1266 = vunpack.c.l.b16 %v1126
    %v1267 = vunpack.c.l.b16 %v1127
    %v1268 = vunpack.c.l.b16 %v1128
    %v1269 = vunpack.c.l.b16 %v1129
    %v1270 = vunpack.c.l.b16 %v1130
    %v1271 = vunpack.c.l.b16 %v1131
    %v1272 = vunpack.c.l.b16 %v1132
    %v1273 = vpack.c.b16 %v1258, %v1257
    %v1274 = vpack.c.b16 %v1260, %v1259
    %v1275 = vpack.c.b16 %v1262, %v1261
    %v1276 = vpack.c.b16 %v1264, %v1263
    %v1277 = vpack.c.b16 %v1266, %v1265
    %v1278 = vpack.c.b16 %v1268, %v1267
    %v1279 = vpack.c.b16 %v1270, %v1269
    %v1280 = vpack.c.b16 %v1272, %v1271
    %1289 = vmatprep.subr.bf16.mxu0 0
    %1290 = vmatpush1.bf16.msra.mxu0 %v1273
    %1291 = vmatprep.subr.bf16.mxu0 0
    %1292 = vmatpush1.bf16.msra.mxu0 %v1274
    %1293 = vmatprep.subr.bf16.mxu0 0
    %1294 = vmatpush1.bf16.msra.mxu0 %v1275
    %1295 = vmatprep.subr.bf16.mxu0 0
    %1296 = vmatpush1.bf16.msra.mxu0 %v1276
    %1297 = vmatprep.subr.bf16.mxu0 0
    %1298 = vmatpush1.bf16.msra.mxu0 %v1277
    %1299 = vmatprep.subr.bf16.mxu0 0
    %1300 = vmatpush1.bf16.msra.mxu0 %v1278
    %1301 = vmatprep.subr.bf16.mxu0 0
    %1302 = vmatpush1.bf16.msra.mxu0 %v1279
    %1303 = vmatprep.subr.bf16.mxu0 0
    %1304 = vmatpush1.bf16.msra.mxu0 %v1280
    %1305 = vmatprep.subr.bf16.mxu0 0
    %1306 = vmatpush1.bf16.msra.mxu0 0
    %1307 = vmatprep.subr.bf16.mxu0 0
    %1308 = vmatpush1.bf16.msra.mxu0 0
    %1309 = vmatprep.subr.bf16.mxu0 0
    %1310 = vmatpush1.bf16.msra.mxu0 0
    %1311 = vmatprep.subr.bf16.mxu0 0
    %1312 = vmatpush1.bf16.msra.mxu0 0
    %1313 = vmatprep.subr.bf16.mxu0 0
    %1314 = vmatpush1.bf16.msra.mxu0 0
    %1315 = vmatprep.subr.bf16.mxu0 0
    %1316 = vmatpush1.bf16.msra.mxu0 0
    %1317 = vmatprep.subr.bf16.mxu0 0
    %1318 = vmatpush1.bf16.msra.mxu0 0
    %1319 = vmatprep.subr.bf16.mxu0 0
    %1320 = vmatpush1.bf16.msra.mxu0 0
    %1321 = vmatprep.mubr.bf16.mxu0 0
    %1322 = vmatmul.mubr.bf16.gmra.mrb[0].mxu0 %v1116
    %v1323 = vpop.f32.mrb[0].mxu0
    %v1324 = vadd.f32 %v1236, %v1323
    %v1325 = vpop.f32.mrb[0].mxu0
    %v1326 = vpop.f32.mrb[0].mxu0
    %v1327 = vpop.f32.mrb[0].mxu0
    %1328 = vdwg.mxu0
    %s1329 = scalar_lea.vmem [#allocation4], 2
    %v1330 = vld [vmem:[%s1329] ss:$2 sm:$0xf]
    %v1331 = vpack.c.bf16 %v1330, %v1330
    %s1332 = scalar_lea.vmem %s7, 128
    %v1333 = vld [vmem:[%s1332] sm:$0xf]
    %v1334 = vld [vmem:[%s1332 + $0x4] sm:$0xf]
    %v1335 = vld [vmem:[%s1332 + $0x8] sm:$0xf]
    %v1336 = vld [vmem:[%s1332 + $0xc] sm:$0xf]
    %v1337 = vld [vmem:[%s1332 + $0x10] sm:$0xf]
    %v1338 = vld [vmem:[%s1332 + $0x14] sm:$0xf]
    %v1339 = vld [vmem:[%s1332 + $0x18] sm:$0xf]
    %v1340 = vld [vmem:[%s1332 + $0x1c] sm:$0xf]
    %v1341 = vld [vmem:[%s1332 + $0x20] sm:$0xf]
    %v1342 = vld [vmem:[%s1332 + $0x24] sm:$0xf]
    %v1343 = vld [vmem:[%s1332 + $0x28] sm:$0xf]
    %v1344 = vld [vmem:[%s1332 + $0x2c] sm:$0xf]
    %v1345 = vld [vmem:[%s1332 + $0x30] sm:$0xf]
    %v1346 = vld [vmem:[%s1332 + $0x34] sm:$0xf]
    %v1347 = vld [vmem:[%s1332 + $0x38] sm:$0xf]
    %v1348 = vld [vmem:[%s1332 + $0x3c] sm:$0xf]
    %v1365 = vunpack.c.l.b16 %v1333
    %v1366 = vunpack.c.l.b16 %v1334
    %v1367 = vunpack.c.l.b16 %v1335
    %v1368 = vunpack.c.l.b16 %v1336
    %v1369 = vunpack.c.l.b16 %v1337
    %v1370 = vunpack.c.l.b16 %v1338
    %v1371 = vunpack.c.l.b16 %v1339
    %v1372 = vunpack.c.l.b16 %v1340
    %v1373 = vunpack.c.l.b16 %v1341
    %v1374 = vunpack.c.l.b16 %v1342
    %v1375 = vunpack.c.l.b16 %v1343
    %v1376 = vunpack.c.l.b16 %v1344
    %v1377 = vunpack.c.l.b16 %v1345
    %v1378 = vunpack.c.l.b16 %v1346
    %v1379 = vunpack.c.l.b16 %v1347
    %v1380 = vunpack.c.l.b16 %v1348
    %v1381 = vpack.c.b16 %v1366, %v1365
    %v1382 = vpack.c.b16 %v1368, %v1367
    %v1383 = vpack.c.b16 %v1370, %v1369
    %v1384 = vpack.c.b16 %v1372, %v1371
    %v1385 = vpack.c.b16 %v1374, %v1373
    %v1386 = vpack.c.b16 %v1376, %v1375
    %v1387 = vpack.c.b16 %v1378, %v1377
    %v1388 = vpack.c.b16 %v1380, %v1379
    %1397 = vmatprep.subr.bf16.mxu0 0
    %1398 = vmatpush1.bf16.msra.mxu0 %v1381
    %1399 = vmatprep.subr.bf16.mxu0 0
    %1400 = vmatpush1.bf16.msra.mxu0 %v1382
    %1401 = vmatprep.subr.bf16.mxu0 0
    %1402 = vmatpush1.bf16.msra.mxu0 %v1383
    %1403 = vmatprep.subr.bf16.mxu0 0
    %1404 = vmatpush1.bf16.msra.mxu0 %v1384
    %1405 = vmatprep.subr.bf16.mxu0 0
    %1406 = vmatpush1.bf16.msra.mxu0 %v1385
    %1407 = vmatprep.subr.bf16.mxu0 0
    %1408 = vmatpush1.bf16.msra.mxu0 %v1386
    %1409 = vmatprep.subr.bf16.mxu0 0
    %1410 = vmatpush1.bf16.msra.mxu0 %v1387
    %1411 = vmatprep.subr.bf16.mxu0 0
    %1412 = vmatpush1.bf16.msra.mxu0 %v1388
    %1413 = vmatprep.subr.bf16.mxu0 0
    %1414 = vmatpush1.bf16.msra.mxu0 0
    %1415 = vmatprep.subr.bf16.mxu0 0
    %1416 = vmatpush1.bf16.msra.mxu0 0
    %1417 = vmatprep.subr.bf16.mxu0 0
    %1418 = vmatpush1.bf16.msra.mxu0 0
    %1419 = vmatprep.subr.bf16.mxu0 0
    %1420 = vmatpush1.bf16.msra.mxu0 0
    %1421 = vmatprep.subr.bf16.mxu0 0
    %1422 = vmatpush1.bf16.msra.mxu0 0
    %1423 = vmatprep.subr.bf16.mxu0 0
    %1424 = vmatpush1.bf16.msra.mxu0 0
    %1425 = vmatprep.subr.bf16.mxu0 0
    %1426 = vmatpush1.bf16.msra.mxu0 0
    %1427 = vmatprep.subr.bf16.mxu0 0
    %1428 = vmatpush1.bf16.msra.mxu0 0
    %1429 = vmatprep.mubr.bf16.mxu0 0
    %1430 = vmatmul.mubr.bf16.gmra.mrb[0].mxu0 %v1331
    %v1431 = vpop.f32.mrb[0].mxu0
    %v1432 = vadd.f32 0.0, %v1431
    %v1433 = vpop.f32.mrb[0].mxu0
    %v1434 = vpop.f32.mrb[0].mxu0
    %v1435 = vpop.f32.mrb[0].mxu0
    %1436 = vdwg.mxu0
    %v1437 = vadd.f32 %v1324, %v1432
    %v1438 = vld [vmem:[%s8] sm:$0x1]
    %v1440 = vlaneseq
    %v1441 = vshrl.u32 %v1440, 7
    %v1442 = vsub.s32 0, %v1441
    %v1443 = vrot.slane %v1438, %v1442
    %v1445 = vadd.f32 %v1437, %v1443
    %v1446 = vmax.f32 %v1445, 0.0
    %1447 = vst [vmem:[#allocation5] sm:$0xf] %v1446
    %v1448 = vld [vmem:[#allocation5] ss:$2 sm:$0x3]
    %v1449 = vpack.c.bf16 %v1448, %v1448
    %v1450 = vld [vmem:[%s9] sm:$0xf]
    %v1451 = vld [vmem:[%s9 + $0x4] sm:$0xf]
    %v1452 = vld [vmem:[%s9 + $0x8] sm:$0xf]
    %v1453 = vld [vmem:[%s9 + $0xc] sm:$0xf]
    %v1454 = vld [vmem:[%s9 + $0x10] sm:$0xf]
    %v1455 = vld [vmem:[%s9 + $0x14] sm:$0xf]
    %v1456 = vld [vmem:[%s9 + $0x18] sm:$0xf]
    %v1457 = vld [vmem:[%s9 + $0x1c] sm:$0xf]
    %v1458 = vld [vmem:[%s9 + $0x20] sm:$0xf]
    %v1459 = vld [vmem:[%s9 + $0x24] sm:$0xf]
    %v1460 = vld [vmem:[%s9 + $0x28] sm:$0xf]
    %v1461 = vld [vmem:[%s9 + $0x2c] sm:$0xf]
    %v1462 = vld [vmem:[%s9 + $0x30] sm:$0xf]
    %v1463 = vld [vmem:[%s9 + $0x34] sm:$0xf]
    %v1464 = vld [vmem:[%s9 + $0x38] sm:$0xf]
    %v1465 = vld [vmem:[%s9 + $0x3c] sm:$0xf]
    %v1466 = vld [vmem:[%s10] sm:$0x1]
    %v1468 = vlaneseq
    %v1469 = vshrl.u32 %v1468, 7
    %v1470 = vsub.s32 0, %v1469
    %v1471 = vrot.slane %v1466, %v1470
    %v1489 = vunpack.c.l.b16 %v1450
    %v1490 = vunpack.c.l.b16 %v1451
    %v1491 = vunpack.c.l.b16 %v1452
    %v1492 = vunpack.c.l.b16 %v1453
    %v1493 = vunpack.c.l.b16 %v1454
    %v1494 = vunpack.c.l.b16 %v1455
    %v1495 = vunpack.c.l.b16 %v1456
    %v1496 = vunpack.c.l.b16 %v1457
    %v1497 = vunpack.c.l.b16 %v1458
    %v1498 = vunpack.c.l.b16 %v1459
    %v1499 = vunpack.c.l.b16 %v1460
    %v1500 = vunpack.c.l.b16 %v1461
    %v1501 = vunpack.c.l.b16 %v1462
    %v1502 = vunpack.c.l.b16 %v1463
    %v1503 = vunpack.c.l.b16 %v1464
    %v1504 = vunpack.c.l.b16 %v1465
    %v1505 = vpack.c.b16 %v1490, %v1489
    %v1506 = vpack.c.b16 %v1492, %v1491
    %v1507 = vpack.c.b16 %v1494, %v1493
    %v1508 = vpack.c.b16 %v1496, %v1495
    %v1509 = vpack.c.b16 %v1498, %v1497
    %v1510 = vpack.c.b16 %v1500, %v1499
    %v1511 = vpack.c.b16 %v1502, %v1501
    %v1512 = vpack.c.b16 %v1504, %v1503
    %1521 = vmatprep.subr.bf16.mxu0 0
    %1522 = vmatpush1.bf16.msra.mxu0 %v1505
    %1523 = vmatprep.subr.bf16.mxu0 0
    %1524 = vmatpush1.bf16.msra.mxu0 %v1506
    %1525 = vmatprep.subr.bf16.mxu0 0
    %1526 = vmatpush1.bf16.msra.mxu0 %v1507
    %1527 = vmatprep.subr.bf16.mxu0 0
    %1528 = vmatpush1.bf16.msra.mxu0 %v1508
    %1529 = vmatprep.subr.bf16.mxu0 0
    %1530 = vmatpush1.bf16.msra.mxu0 %v1509
    %1531 = vmatprep.subr.bf16.mxu0 0
    %1532 = vmatpush1.bf16.msra.mxu0 %v1510
    %1533 = vmatprep.subr.bf16.mxu0 0
    %1534 = vmatpush1.bf16.msra.mxu0 %v1511
    %1535 = vmatprep.subr.bf16.mxu0 0
    %1536 = vmatpush1.bf16.msra.mxu0 %v1512
    %1537 = vmatprep.subr.bf16.mxu0 0
    %1538 = vmatpush1.bf16.msra.mxu0 0
    %1539 = vmatprep.subr.bf16.mxu0 0
    %1540 = vmatpush1.bf16.msra.mxu0 0
    %1541 = vmatprep.subr.bf16.mxu0 0
    %1542 = vmatpush1.bf16.msra.mxu0 0
    %1543 = vmatprep.subr.bf16.mxu0 0
    %1544 = vmatpush1.bf16.msra.mxu0 0
    %1545 = vmatprep.subr.bf16.mxu0 0
    %1546 = vmatpush1.bf16.msra.mxu0 0
    %1547 = vmatprep.subr.bf16.mxu0 0
    %1548 = vmatpush1.bf16.msra.mxu0 0
    %1549 = vmatprep.subr.bf16.mxu0 0
    %1550 = vmatpush1.bf16.msra.mxu0 0
    %1551 = vmatprep.subr.bf16.mxu0 0
    %1552 = vmatpush1.bf16.msra.mxu0 0
    %1553 = vmatprep.mubr.bf16.mxu0 0
    %1554 = vmatmul.mubr.bf16.gmra.mrb[0].mxu0 %v1449
    %v1555 = vpop.f32.mrb[0].mxu0
    %v1556 = vadd.f32 %v1471, %v1555
    %v1557 = vpop.f32.mrb[0].mxu0
    %v1558 = vpop.f32.mrb[0].mxu0
    %v1559 = vpop.f32.mrb[0].mxu0
    %1560 = vdwg.mxu0
    %1561 = vst [vmem:[#allocation6] sm:$0x3] %v1556
    // Predicated region
    $region46: #{conv_encoder_forward.1} parent=1 // pred_check
      _
    $region47: #{conv_encoder_forward.1} parent=1 // pred_check_branch
      %1563 = sbr.rel (0) target = $region49
    $region48: #{conv_encoder_forward.1} parent=1 // pred_region
      %s1565 = ssub.s32 32, 32
      %1566 = vsyncadd [#allocation7], %s1565
      %s1568 = sshll.u32 [#allocation6], 4
      %s1569 = int_to_ptr.vmem [resolvable:$true] %s1568
      %1571 = dma.vmem_to_hbm [thread:$0]  %s1569, 32, %s11, [#allocation7]
    $region49: #{conv_encoder_forward.1} parent=1 // pred_fallthru
      _
    // Predicated region
    $region50: #{conv_encoder_forward.1} parent=1 // pred_check
      _
    $region51: #{conv_encoder_forward.1} parent=1 // pred_check_branch
      %1573 = sbr.rel (0) target = $region53
    $region52: #{conv_encoder_forward.1} parent=1 // pred_region
      %1574 = dma.done [#allocation7], 32
    $region53: #{conv_encoder_forward.1} parent=1 // pred_fallthru
      _
    %1575 = vsyncpa [#allocation7], 1

</llo_original>
